<compile_context>
chip_gen: v7x
topology: tpu7x:2x2x1
jax: 0.10.0
libtpu: 0.0.40
codegen_flags: <defaults>
</compile_context>

<pallas_src>
import jax
import jax.numpy as jnp
from jax.experimental import pallas as pl
from jax.experimental.pallas import tpu as pltpu

IN_DIM = 64        # flattened input features (e.g. 8x8)
HID_DIM = 32
Z_DIM = 16

BATCH = 256        # rows per pallas_call (small demo size; 2 grid steps)
TILE_B = 128       # batch rows per grid step (multiple of 8*16 -> native sublane tiling)

OUT_W = IN_DIM + 2 * Z_DIM   # pred | mu | logvar = 96 useful lanes
OUT_PAD = 128                # pad packed output slab to 128 lanes (unmasked full-width stores)


def vae_kernel(x_ref, eps_ref,
               w_e1_ref, b_e1_ref,
               w_mlv_ref, b_mlv_ref,
               w_d1_ref, b_d1_ref,
               w_d2_ref, b_d2_ref,
               out_ref):
    x = x_ref[...]

    # ----- encoder: Linear -> ReLU -> fused [mu || logvar] Linear -----
    h = jnp.dot(x, w_e1_ref[...], preferred_element_type=jnp.float32) + b_e1_ref[...]
    h = jnp.maximum(h, 0.0)
    mulv = jnp.dot(h, w_mlv_ref[...], preferred_element_type=jnp.float32) + b_mlv_ref[...]
    z_mu = mulv[:, :Z_DIM]
    z_lv = mulv[:, Z_DIM:]

    # ----- reparameterization: z = eps * exp(logvar / 2) + mu -----
    z = eps_ref[...] * jnp.exp(z_lv * 0.5) + z_mu

    # ----- decoder: Linear -> ReLU -> Linear -> sigmoid -----
    hd = jnp.dot(z, w_d1_ref[...], preferred_element_type=jnp.float32) + b_d1_ref[...]
    hd = jnp.maximum(hd, 0.0)
    logits = jnp.dot(hd, w_d2_ref[...], preferred_element_type=jnp.float32) + b_d2_ref[...]
    pred = jax.nn.sigmoid(logits)

    # Pack pred | mu | logvar | zero-pad into one lane-dense 128-wide slab so the output
    # pipeline does a single unmasked full-width store per grid step.
    pad = jnp.zeros((pred.shape[0], OUT_PAD - OUT_W), jnp.float32)
    out_ref[...] = jnp.concatenate([pred, mulv, pad], axis=-1)


def _resident_spec(arr):
    """Full-array block with a constant block index -> VMEM-resident across grid steps."""
    ndim = arr.ndim
    return pl.BlockSpec(arr.shape, lambda i, _n=ndim: (0,) * _n)


@jax.jit
def vae_forward(x, eps, kparams):
    """x: (B, IN_DIM), eps: (B, Z_DIM), kparams: kernel-layout params (pre-transposed/fused)."""
    B = x.shape[0]
    assert B % TILE_B == 0, "batch must be a multiple of TILE_B"

    ordered = (kparams["w_e1"], kparams["b_e1"],
               kparams["w_mlv"], kparams["b_mlv"],
               kparams["w_d1"], kparams["b_d1"],
               kparams["w_d2"], kparams["b_d2"])

    in_specs = [pl.BlockSpec((TILE_B, IN_DIM), lambda i: (i, 0)),   # x: tiled over batch
                pl.BlockSpec((TILE_B, Z_DIM), lambda i: (i, 0))]    # eps: tiled over batch
    in_specs += [_resident_spec(a) for a in ordered]                # weights: resident

    slab = pl.pallas_call(
        vae_kernel,
        out_shape=jax.ShapeDtypeStruct((B, OUT_PAD), jnp.float32),
        grid=(B // TILE_B,),
        in_specs=in_specs,
        out_specs=pl.BlockSpec((TILE_B, OUT_PAD), lambda i: (i, 0)),
        compiler_params=pltpu.CompilerParams(
            dimension_semantics=("parallel",)),
    )(x, eps, *ordered)

    predicted = slab[:, :IN_DIM]
    z_mu = slab[:, IN_DIM:IN_DIM + Z_DIM]
    z_logvar = slab[:, IN_DIM + Z_DIM:OUT_W]
    return predicted, z_mu, z_logvar


def init_params(key):
    """Deterministic synthetic parameters with PyTorch nn.Linear layout (out, in)."""
    ks = jax.random.split(key, 10)

    def lin(kw, kb, out_d, in_d):
        scale = 1.0 / jnp.sqrt(in_d)
        w = jax.random.uniform(kw, (out_d, in_d), jnp.float32, -scale, scale)
        b = jax.random.uniform(kb, (out_d,), jnp.float32, -scale, scale)
        return w, b

    p = {}
    p["w_e1"], p["b_e1"] = lin(ks[0], ks[1], HID_DIM, IN_DIM)
    p["w_mu"], p["b_mu"] = lin(ks[2], ks[3], Z_DIM, HID_DIM)
    p["w_lv"], p["b_lv"] = lin(ks[4], ks[5], Z_DIM, HID_DIM)
    p["w_d1"], p["b_d1"] = lin(ks[6], ks[7], HID_DIM, Z_DIM)
    p["w_d2"], p["b_d2"] = lin(ks[8], ks[9], IN_DIM, HID_DIM)
    return p


def prepare_params(p):
    """One-time host-side prep: (out,in) -> (in,out), fuse mu/logvar, 2-D biases.

    Done once at load time so no transpose/reshape/concat ops sit on the per-call path.
    """
    return {
        "w_e1": p["w_e1"].T,
        "b_e1": p["b_e1"].reshape(1, -1),
        "w_mlv": jnp.concatenate([p["w_mu"].T, p["w_lv"].T], axis=1),   # (HID, 2*Z)
        "b_mlv": jnp.concatenate([p["b_mu"], p["b_lv"]]).reshape(1, -1),
        "w_d1": p["w_d1"].T,
        "b_d1": p["b_d1"].reshape(1, -1),
        "w_d2": p["w_d2"].T,
        "b_d2": p["b_d2"].reshape(1, -1),
    }


if __name__ == "__main__":
    key = jax.random.PRNGKey(0)
    k_x, k_eps, k_p = jax.random.split(key, 3)

    x = jax.random.uniform(k_x, (BATCH, IN_DIM), jnp.float32)     # input data
    eps = jax.random.normal(k_eps, (BATCH, Z_DIM), jnp.float32)   # stands in for randn_like(std)
    params = init_params(k_p)
    kparams = prepare_params(params)                              # one-time, off the hot path
    kparams = jax.tree_util.tree_map(jax.block_until_ready, kparams)

    predicted, z_mu, z_logvar = jax.block_until_ready(vae_forward(x, eps, kparams))

    # ----- reference check in plain JAX (PyTorch weight layout) -----
    h = jnp.maximum(x @ params["w_e1"].T + params["b_e1"], 0.0)
    mu_ref = h @ params["w_mu"].T + params["b_mu"]
    lv_ref = h @ params["w_lv"].T + params["b_lv"]
    z_ref = eps * jnp.exp(lv_ref / 2) + mu_ref
    hd = jnp.maximum(z_ref @ params["w_d1"].T + params["b_d1"], 0.0)
    pred_ref = jax.nn.sigmoid(hd @ params["w_d2"].T + params["b_d2"])

    assert jnp.allclose(predicted, pred_ref, atol=1e-5)
    assert jnp.allclose(z_mu, mu_ref, atol=1e-5)
    assert jnp.allclose(z_logvar, lv_ref, atol=1e-5)
    print("KERNEL_OK")
</pallas_src>

<mosaic_0001>
module attributes {stable_mosaic.version = 11 : i64} {
  func.func @vae_kernel(%arg0: i32, %arg1: memref<128x64xf32, #tpu.memory_space<vmem>>, %arg2: memref<128x16xf32, #tpu.memory_space<vmem>>, %arg3: memref<64x32xf32, #tpu.memory_space<vmem>>, %arg4: memref<1x32xf32, #tpu.memory_space<vmem>>, %arg5: memref<32x32xf32, #tpu.memory_space<vmem>>, %arg6: memref<1x32xf32, #tpu.memory_space<vmem>>, %arg7: memref<16x32xf32, #tpu.memory_space<vmem>>, %arg8: memref<1x32xf32, #tpu.memory_space<vmem>>, %arg9: memref<32x64xf32, #tpu.memory_space<vmem>>, %arg10: memref<1x64xf32, #tpu.memory_space<vmem>>, %arg11: memref<128x128xf32, #tpu.memory_space<vmem>>) attributes {dimension_semantics = [#tpu.dimension_semantics<parallel>], iteration_bounds = array<i64: 2>, scalar_prefetch = 0 : i64, scratch_operands = 0 : i64, tpu.core_type = #tpu.core_type<tc>, window_params = [{transform_indices = @transform_0, window_bounds = array<i64: 128, 64>}, {transform_indices = @transform_1, window_bounds = array<i64: 128, 16>}, {pipeline_mode = #tpu.pipeline_mode<synchronous>, transform_indices = @transform_2, window_bounds = array<i64: 64, 32>}, {pipeline_mode = #tpu.pipeline_mode<synchronous>, transform_indices = @transform_3, window_bounds = array<i64: 1, 32>}, {pipeline_mode = #tpu.pipeline_mode<synchronous>, transform_indices = @transform_4, window_bounds = array<i64: 32, 32>}, {pipeline_mode = #tpu.pipeline_mode<synchronous>, transform_indices = @transform_5, window_bounds = array<i64: 1, 32>}, {pipeline_mode = #tpu.pipeline_mode<synchronous>, transform_indices = @transform_6, window_bounds = array<i64: 16, 32>}, {pipeline_mode = #tpu.pipeline_mode<synchronous>, transform_indices = @transform_7, window_bounds = array<i64: 1, 32>}, {pipeline_mode = #tpu.pipeline_mode<synchronous>, transform_indices = @transform_8, window_bounds = array<i64: 32, 64>}, {pipeline_mode = #tpu.pipeline_mode<synchronous>, transform_indices = @transform_9, window_bounds = array<i64: 1, 64>}, {transform_indices = @transform_10, window_bounds = array<i64: 128, 128>}]} {
    %c0 = arith.constant 0 : index
    %c0_0 = arith.constant 0 : index
    %0 = vector.load %arg1[%c0, %c0_0] : memref<128x64xf32, #tpu.memory_space<vmem>>, vector<128x64xf32>
    %c0_1 = arith.constant 0 : index
    %c0_2 = arith.constant 0 : index
    %1 = vector.load %arg3[%c0_1, %c0_2] : memref<64x32xf32, #tpu.memory_space<vmem>>, vector<64x32xf32>
    %cst = arith.constant dense<0.000000e+00> : vector<128x32xf32>
    %2 = tpu.matmul %0, %1, %cst {dimension_numbers = #tpu.dot_dimension_numbers<[1], [0], [0], [1], [0, 0, 1, 1], [], []>} : vector<128x64xf32>, vector<64x32xf32>, vector<128x32xf32> -> vector<128x32xf32>
    %c0_3 = arith.constant 0 : index
    %c0_4 = arith.constant 0 : index
    %3 = vector.load %arg4[%c0_3, %c0_4] : memref<1x32xf32, #tpu.memory_space<vmem>>, vector<1x32xf32>
    %4 = vector.broadcast %3 : vector<1x32xf32> to vector<128x32xf32>
    %5 = arith.addf %2, %4 : vector<128x32xf32>
    %cst_5 = arith.constant 0.000000e+00 : f32
    %6 = vector.broadcast %cst_5 : f32 to vector<128x32xf32>
    %7 = arith.maximumf %5, %6 : vector<128x32xf32>
    %c0_6 = arith.constant 0 : index
    %c0_7 = arith.constant 0 : index
    %8 = vector.load %arg5[%c0_6, %c0_7] : memref<32x32xf32, #tpu.memory_space<vmem>>, vector<32x32xf32>
    %cst_8 = arith.constant dense<0.000000e+00> : vector<128x32xf32>
    %9 = tpu.matmul %7, %8, %cst_8 {dimension_numbers = #tpu.dot_dimension_numbers<[1], [0], [0], [1], [0, 0, 1, 1], [], []>} : vector<128x32xf32>, vector<32x32xf32>, vector<128x32xf32> -> vector<128x32xf32>
    %c0_9 = arith.constant 0 : index
    %c0_10 = arith.constant 0 : index
    %10 = vector.load %arg6[%c0_9, %c0_10] : memref<1x32xf32, #tpu.memory_space<vmem>>, vector<1x32xf32>
    %11 = vector.broadcast %10 : vector<1x32xf32> to vector<128x32xf32>
    %12 = arith.addf %9, %11 : vector<128x32xf32>
    %13 = vector.extract_strided_slice %12 {offsets = [0, 0], sizes = [128, 16], strides = [1, 1]} : vector<128x32xf32> to vector<128x16xf32>
    %14 = vector.extract_strided_slice %12 {offsets = [0, 16], sizes = [128, 16], strides = [1, 1]} : vector<128x32xf32> to vector<128x16xf32>
    %c0_11 = arith.constant 0 : index
    %c0_12 = arith.constant 0 : index
    %15 = vector.load %arg2[%c0_11, %c0_12] : memref<128x16xf32, #tpu.memory_space<vmem>>, vector<128x16xf32>
    %cst_13 = arith.constant 5.000000e-01 : f32
    %16 = vector.broadcast %cst_13 : f32 to vector<128x16xf32>
    %17 = arith.mulf %14, %16 : vector<128x16xf32>
    %18 = math.exp %17 : vector<128x16xf32>
    %19 = arith.mulf %15, %18 : vector<128x16xf32>
    %20 = arith.addf %19, %13 : vector<128x16xf32>
    %c0_14 = arith.constant 0 : index
    %c0_15 = arith.constant 0 : index
    %21 = vector.load %arg7[%c0_14, %c0_15] : memref<16x32xf32, #tpu.memory_space<vmem>>, vector<16x32xf32>
    %cst_16 = arith.constant dense<0.000000e+00> : vector<128x32xf32>
    %22 = tpu.matmul %20, %21, %cst_16 {dimension_numbers = #tpu.dot_dimension_numbers<[1], [0], [0], [1], [0, 0, 1, 1], [], []>} : vector<128x16xf32>, vector<16x32xf32>, vector<128x32xf32> -> vector<128x32xf32>
    %c0_17 = arith.constant 0 : index
    %c0_18 = arith.constant 0 : index
    %23 = vector.load %arg8[%c0_17, %c0_18] : memref<1x32xf32, #tpu.memory_space<vmem>>, vector<1x32xf32>
    %24 = vector.broadcast %23 : vector<1x32xf32> to vector<128x32xf32>
    %25 = arith.addf %22, %24 : vector<128x32xf32>
    %cst_19 = arith.constant 0.000000e+00 : f32
    %26 = vector.broadcast %cst_19 : f32 to vector<128x32xf32>
    %27 = arith.maximumf %25, %26 : vector<128x32xf32>
    %c0_20 = arith.constant 0 : index
    %c0_21 = arith.constant 0 : index
    %28 = vector.load %arg9[%c0_20, %c0_21] : memref<32x64xf32, #tpu.memory_space<vmem>>, vector<32x64xf32>
    %cst_22 = arith.constant dense<0.000000e+00> : vector<128x64xf32>
    %29 = tpu.matmul %27, %28, %cst_22 {dimension_numbers = #tpu.dot_dimension_numbers<[1], [0], [0], [1], [0, 0, 1, 1], [], []>} : vector<128x32xf32>, vector<32x64xf32>, vector<128x64xf32> -> vector<128x64xf32>
    %c0_23 = arith.constant 0 : index
    %c0_24 = arith.constant 0 : index
    %30 = vector.load %arg10[%c0_23, %c0_24] : memref<1x64xf32, #tpu.memory_space<vmem>>, vector<1x64xf32>
    %31 = vector.broadcast %30 : vector<1x64xf32> to vector<128x64xf32>
    %32 = arith.addf %29, %31 : vector<128x64xf32>
    %33 = arith.negf %32 : vector<128x64xf32>
    %34 = math.exp %33 : vector<128x64xf32>
    %cst_25 = arith.constant 1.000000e+00 : f32
    %35 = vector.broadcast %cst_25 : f32 to vector<128x64xf32>
    %36 = arith.addf %35, %34 : vector<128x64xf32>
    %37 = arith.divf %35, %36 : vector<128x64xf32>
    %cst_26 = arith.constant 0.000000e+00 : f32
    %38 = vector.broadcast %cst_26 : f32 to vector<128x32xf32>
    %39 = tpu.concatenate %37, %12, %38 in 1 : vector<128x64xf32>, vector<128x32xf32>, vector<128x32xf32> -> vector<128x128xf32>
    %c0_27 = arith.constant 0 : index
    %c0_28 = arith.constant 0 : index
    %40 = vector.load %arg11[%c0_27, %c0_28] : memref<128x128xf32, #tpu.memory_space<vmem>>, vector<128x128xf32>
    tpu.vector_store %arg11[%c0_27, %c0_28], %39 {strides = array<i32>} : memref<128x128xf32, #tpu.memory_space<vmem>>, vector<128x128xf32>,
    return
  }
  func.func @transform_0(%arg0: i32) -> (i32, i32) {
    %c0_i32 = arith.constant 0 : i32
    %c0_i32_0 = arith.constant 0 : i32
    return %arg0, %c0_i32 : i32, i32
  }
  func.func @transform_1(%arg0: i32) -> (i32, i32) {
    %c0_i32 = arith.constant 0 : i32
    %c0_i32_0 = arith.constant 0 : i32
    return %arg0, %c0_i32 : i32, i32
  }
  func.func @transform_2(%arg0: i32) -> (i32, i32) {
    %c0_i32 = arith.constant 0 : i32
    %c0_i32_0 = arith.constant 0 : i32
    %c0_i32_1 = arith.constant 0 : i32
    return %c0_i32, %c0_i32_0 : i32, i32
  }
  func.func @transform_3(%arg0: i32) -> (i32, i32) {
    %c0_i32 = arith.constant 0 : i32
    %c0_i32_0 = arith.constant 0 : i32
    %c0_i32_1 = arith.constant 0 : i32
    return %c0_i32, %c0_i32_0 : i32, i32
  }
  func.func @transform_4(%arg0: i32) -> (i32, i32) {
    %c0_i32 = arith.constant 0 : i32
    %c0_i32_0 = arith.constant 0 : i32
    %c0_i32_1 = arith.constant 0 : i32
    return %c0_i32, %c0_i32_0 : i32, i32
  }
  func.func @transform_5(%arg0: i32) -> (i32, i32) {
    %c0_i32 = arith.constant 0 : i32
    %c0_i32_0 = arith.constant 0 : i32
    %c0_i32_1 = arith.constant 0 : i32
    return %c0_i32, %c0_i32_0 : i32, i32
  }
  func.func @transform_6(%arg0: i32) -> (i32, i32) {
    %c0_i32 = arith.constant 0 : i32
    %c0_i32_0 = arith.constant 0 : i32
    %c0_i32_1 = arith.constant 0 : i32
    return %c0_i32, %c0_i32_0 : i32, i32
  }
  func.func @transform_7(%arg0: i32) -> (i32, i32) {
    %c0_i32 = arith.constant 0 : i32
    %c0_i32_0 = arith.constant 0 : i32
    %c0_i32_1 = arith.constant 0 : i32
    return %c0_i32, %c0_i32_0 : i32, i32
  }
  func.func @transform_8(%arg0: i32) -> (i32, i32) {
    %c0_i32 = arith.constant 0 : i32
    %c0_i32_0 = arith.constant 0 : i32
    %c0_i32_1 = arith.constant 0 : i32
    return %c0_i32, %c0_i32_0 : i32, i32
  }
  func.func @transform_9(%arg0: i32) -> (i32, i32) {
    %c0_i32 = arith.constant 0 : i32
    %c0_i32_0 = arith.constant 0 : i32
    %c0_i32_1 = arith.constant 0 : i32
    return %c0_i32, %c0_i32_0 : i32, i32
  }
  func.func @transform_10(%arg0: i32) -> (i32, i32) {
    %c0_i32 = arith.constant 0 : i32
    %c0_i32_0 = arith.constant 0 : i32
    return %arg0, %c0_i32 : i32, i32
  }
}

</mosaic_0001>

<llo_original>
// kernel: vae_forward.1
$region0: #{vae_forward.1}
  #allocation0 [shape = 'u32[]', space=smem, size = 0x4, offset = 0x4, fixed_abs, tag = 'smem constant byte address 0x4 - core index']
  #allocation1 [shape = 'u32[144,128]{1,0:T(1,128)}', space=vmem, size = 0x12000, scoped, tag = 'internal scratch']
  %s0 = inlined_call_operand.vmem [shape: f32[256,64], index: 0, kind: input, shape index: {}]
  %s1 = inlined_call_operand.vmem [shape: f32[256,16], index: 1, kind: input, shape index: {}]
  %s2 = inlined_call_operand.vmem [shape: f32[64,32], index: 2, kind: input, shape index: {}]
  %s3 = inlined_call_operand.vmem [shape: f32[1,32], index: 3, kind: input, shape index: {}]
  %s4 = inlined_call_operand.vmem [shape: f32[32,32], index: 4, kind: input, shape index: {}]
  %s5 = inlined_call_operand.vmem [shape: f32[1,32], index: 5, kind: input, shape index: {}]
  %s6 = inlined_call_operand.vmem [shape: f32[16,32], index: 6, kind: input, shape index: {}]
  %s7 = inlined_call_operand.vmem [shape: f32[1,32], index: 7, kind: input, shape index: {}]
  %s8 = inlined_call_operand.vmem [shape: f32[32,64], index: 8, kind: input, shape index: {}]
  %s9 = inlined_call_operand.vmem [shape: f32[1,64], index: 9, kind: input, shape index: {}]
  %s10 = inlined_call_operand.vmem [shape: f32[256,128], index: 10, kind: output, shape index: {}]
  %s11 = sld [smem:[#allocation0]]
  $region73: #{vae_forward.1} parent=0
    _
  %s13 = ssub.s32 1, %s11
  %s14 = scalar_select 0, %s13, %s11
  loop: start=0, step=1, limit=4
  $region2: #{vae_forward.1} parent=0 // loop_pre_header
    _
  $region3: #{vae_forward.1} parent=0 // loop_header
    %s16 = sphi 0, %s20
    %p17 = scmp.ge.s32.totalorder %s16, 4
    %s26 = sphi 0, %s28
    %s29 = sphi 0, %s26
    %s30 = sphi 0, %s29
    %s46 = sphi 0, %s30
    %s52 = sphi 0, %s54
    %s55 = sphi 0, %s52
    %s56 = sphi 0, %s55
    %s72 = sphi 0, %s56
    %s76 = sphi 0, %s76
    %s78 = sphi 0, %s76
    %s79 = sphi 0, %s78
    %s93 = sphi 0, %s79
    %s97 = sphi 0, %s97
    %s99 = sphi 0, %s97
    %s100 = sphi 0, %s99
    %s114 = sphi 0, %s100
    %s118 = sphi 0, %s118
    %s120 = sphi 0, %s118
    %s121 = sphi 0, %s120
    %s135 = sphi 0, %s121
    %s139 = sphi 0, %s139
    %s141 = sphi 0, %s139
    %s142 = sphi 0, %s141
    %s156 = sphi 0, %s142
    %s160 = sphi 0, %s160
    %s162 = sphi 0, %s160
    %s163 = sphi 0, %s162
    %s177 = sphi 0, %s163
    %s181 = sphi 0, %s181
    %s183 = sphi 0, %s181
    %s184 = sphi 0, %s183
    %s198 = sphi 0, %s184
    %s202 = sphi 0, %s202
    %s204 = sphi 0, %s202
    %s205 = sphi 0, %s204
    %s219 = sphi 0, %s205
    %s223 = sphi 0, %s223
    %s225 = sphi 0, %s223
    %s226 = sphi 0, %s225
    %s240 = sphi 0, %s226
    %s246 = sphi 0, %s248
    %s249 = sphi 0, %s246
    %s250 = sphi 0, %s249
    %s266 = sphi 0, %s250
  $region4: #{vae_forward.1} parent=0 // loop_header_branch
    %19 = sbr.rel (%p17) target = $region8
  $region5: #{vae_forward.1} parent=0 // loop_body
    %s21 = ssub.s32 %s16, 1
    %s22 = ssub.s32 %s16, 2
    %s23 = sadd.s32 %s16, 1
    %s24 = ssub.s32 %s16, %s23
    %p25 = scmp.eq.s32.totalorder %s24, 0
    %s27 = sadd.s32 %s26, 1
    %s28 = scalar_select %p25, %s26, %s27
    %p31 = pneg %p25
    %p32 = scmp.eq.s32.totalorder %s16, 1
    %p33 = por %p31, %p32
    %p34 = scmp.ne.s32.totalorder %s26, %s29
    %p35 = scmp.eq.s32.totalorder %s16, 0
    %p36 = por %p34, %p35
    %p37 = scmp.ne.s32.totalorder %s26, %s29
    %p38 = scmp.eq.s32.totalorder %s21, 1
    %p39 = por %p37, %p38
    %p40 = scmp.ne.s32.totalorder %s29, %s30
    %p41 = scmp.eq.s32.totalorder %s21, 0
    %p42 = por %p40, %p41
    %p43 = scmp.ne.s32.totalorder %s29, %s30
    %p44 = scmp.eq.s32.totalorder %s22, 1
    %p45 = por %p43, %p44
    %p47 = scmp.ne.s32.totalorder %s30, %s46
    %p48 = scmp.eq.s32.totalorder %s22, 0
    %p49 = por %p47, %p48
    %s50 = ssub.s32 %s16, %s23
    %p51 = scmp.eq.s32.totalorder %s50, 0
    %s53 = sadd.s32 %s52, 1
    %s54 = scalar_select %p51, %s52, %s53
    %p57 = pneg %p51
    %p58 = scmp.eq.s32.totalorder %s16, 1
    %p59 = por %p57, %p58
    %p60 = scmp.ne.s32.totalorder %s52, %s55
    %p61 = scmp.eq.s32.totalorder %s16, 0
    %p62 = por %p60, %p61
    %p63 = scmp.ne.s32.totalorder %s52, %s55
    %p64 = scmp.eq.s32.totalorder %s21, 1
    %p65 = por %p63, %p64
    %p66 = scmp.ne.s32.totalorder %s55, %s56
    %p67 = scmp.eq.s32.totalorder %s21, 0
    %p68 = por %p66, %p67
    %p69 = scmp.ne.s32.totalorder %s55, %s56
    %p70 = scmp.eq.s32.totalorder %s22, 1
    %p71 = por %p69, %p70
    %p73 = scmp.ne.s32.totalorder %s56, %s72
    %p74 = scmp.eq.s32.totalorder %s22, 0
    %p75 = por %p73, %p74
    %s77 = sadd.s32 %s76, 1
    %p80 = scmp.eq.s32.totalorder %s16, 1
    %p81 = scmp.ne.s32.totalorder %s76, %s78
    %p82 = scmp.eq.s32.totalorder %s16, 0
    %p83 = por %p81, %p82
    %p84 = scmp.ne.s32.totalorder %s76, %s78
    %p85 = scmp.eq.s32.totalorder %s21, 1
    %p86 = por %p84, %p85
    %p87 = scmp.ne.s32.totalorder %s78, %s79
    %p88 = scmp.eq.s32.totalorder %s21, 0
    %p89 = por %p87, %p88
    %p90 = scmp.ne.s32.totalorder %s78, %s79
    %p91 = scmp.eq.s32.totalorder %s22, 1
    %p92 = por %p90, %p91
    %p94 = scmp.ne.s32.totalorder %s79, %s93
    %p95 = scmp.eq.s32.totalorder %s22, 0
    %p96 = por %p94, %p95
    %s98 = sadd.s32 %s97, 1
    %p101 = scmp.eq.s32.totalorder %s16, 1
    %p102 = scmp.ne.s32.totalorder %s97, %s99
    %p103 = scmp.eq.s32.totalorder %s16, 0
    %p104 = por %p102, %p103
    %p105 = scmp.ne.s32.totalorder %s97, %s99
    %p106 = scmp.eq.s32.totalorder %s21, 1
    %p107 = por %p105, %p106
    %p108 = scmp.ne.s32.totalorder %s99, %s100
    %p109 = scmp.eq.s32.totalorder %s21, 0
    %p110 = por %p108, %p109
    %p111 = scmp.ne.s32.totalorder %s99, %s100
    %p112 = scmp.eq.s32.totalorder %s22, 1
    %p113 = por %p111, %p112
    %p115 = scmp.ne.s32.totalorder %s100, %s114
    %p116 = scmp.eq.s32.totalorder %s22, 0
    %p117 = por %p115, %p116
    %s119 = sadd.s32 %s118, 1
    %p122 = scmp.eq.s32.totalorder %s16, 1
    %p123 = scmp.ne.s32.totalorder %s118, %s120
    %p124 = scmp.eq.s32.totalorder %s16, 0
    %p125 = por %p123, %p124
    %p126 = scmp.ne.s32.totalorder %s118, %s120
    %p127 = scmp.eq.s32.totalorder %s21, 1
    %p128 = por %p126, %p127
    %p129 = scmp.ne.s32.totalorder %s120, %s121
    %p130 = scmp.eq.s32.totalorder %s21, 0
    %p131 = por %p129, %p130
    %p132 = scmp.ne.s32.totalorder %s120, %s121
    %p133 = scmp.eq.s32.totalorder %s22, 1
    %p134 = por %p132, %p133
    %p136 = scmp.ne.s32.totalorder %s121, %s135
    %p137 = scmp.eq.s32.totalorder %s22, 0
    %p138 = por %p136, %p137
    %s140 = sadd.s32 %s139, 1
    %p143 = scmp.eq.s32.totalorder %s16, 1
    %p144 = scmp.ne.s32.totalorder %s139, %s141
    %p145 = scmp.eq.s32.totalorder %s16, 0
    %p146 = por %p144, %p145
    %p147 = scmp.ne.s32.totalorder %s139, %s141
    %p148 = scmp.eq.s32.totalorder %s21, 1
    %p149 = por %p147, %p148
    %p150 = scmp.ne.s32.totalorder %s141, %s142
    %p151 = scmp.eq.s32.totalorder %s21, 0
    %p152 = por %p150, %p151
    %p153 = scmp.ne.s32.totalorder %s141, %s142
    %p154 = scmp.eq.s32.totalorder %s22, 1
    %p155 = por %p153, %p154
    %p157 = scmp.ne.s32.totalorder %s142, %s156
    %p158 = scmp.eq.s32.totalorder %s22, 0
    %p159 = por %p157, %p158
    %s161 = sadd.s32 %s160, 1
    %p164 = scmp.eq.s32.totalorder %s16, 1
    %p165 = scmp.ne.s32.totalorder %s160, %s162
    %p166 = scmp.eq.s32.totalorder %s16, 0
    %p167 = por %p165, %p166
    %p168 = scmp.ne.s32.totalorder %s160, %s162
    %p169 = scmp.eq.s32.totalorder %s21, 1
    %p170 = por %p168, %p169
    %p171 = scmp.ne.s32.totalorder %s162, %s163
    %p172 = scmp.eq.s32.totalorder %s21, 0
    %p173 = por %p171, %p172
    %p174 = scmp.ne.s32.totalorder %s162, %s163
    %p175 = scmp.eq.s32.totalorder %s22, 1
    %p176 = por %p174, %p175
    %p178 = scmp.ne.s32.totalorder %s163, %s177
    %p179 = scmp.eq.s32.totalorder %s22, 0
    %p180 = por %p178, %p179
    %s182 = sadd.s32 %s181, 1
    %p185 = scmp.eq.s32.totalorder %s16, 1
    %p186 = scmp.ne.s32.totalorder %s181, %s183
    %p187 = scmp.eq.s32.totalorder %s16, 0
    %p188 = por %p186, %p187
    %p189 = scmp.ne.s32.totalorder %s181, %s183
    %p190 = scmp.eq.s32.totalorder %s21, 1
    %p191 = por %p189, %p190
    %p192 = scmp.ne.s32.totalorder %s183, %s184
    %p193 = scmp.eq.s32.totalorder %s21, 0
    %p194 = por %p192, %p193
    %p195 = scmp.ne.s32.totalorder %s183, %s184
    %p196 = scmp.eq.s32.totalorder %s22, 1
    %p197 = por %p195, %p196
    %p199 = scmp.ne.s32.totalorder %s184, %s198
    %p200 = scmp.eq.s32.totalorder %s22, 0
    %p201 = por %p199, %p200
    %s203 = sadd.s32 %s202, 1
    %p206 = scmp.eq.s32.totalorder %s16, 1
    %p207 = scmp.ne.s32.totalorder %s202, %s204
    %p208 = scmp.eq.s32.totalorder %s16, 0
    %p209 = por %p207, %p208
    %p210 = scmp.ne.s32.totalorder %s202, %s204
    %p211 = scmp.eq.s32.totalorder %s21, 1
    %p212 = por %p210, %p211
    %p213 = scmp.ne.s32.totalorder %s204, %s205
    %p214 = scmp.eq.s32.totalorder %s21, 0
    %p215 = por %p213, %p214
    %p216 = scmp.ne.s32.totalorder %s204, %s205
    %p217 = scmp.eq.s32.totalorder %s22, 1
    %p218 = por %p216, %p217
    %p220 = scmp.ne.s32.totalorder %s205, %s219
    %p221 = scmp.eq.s32.totalorder %s22, 0
    %p222 = por %p220, %p221
    %s224 = sadd.s32 %s223, 1
    %p227 = scmp.eq.s32.totalorder %s16, 1
    %p228 = scmp.ne.s32.totalorder %s223, %s225
    %p229 = scmp.eq.s32.totalorder %s16, 0
    %p230 = por %p228, %p229
    %p231 = scmp.ne.s32.totalorder %s223, %s225
    %p232 = scmp.eq.s32.totalorder %s21, 1
    %p233 = por %p231, %p232
    %p234 = scmp.ne.s32.totalorder %s225, %s226
    %p235 = scmp.eq.s32.totalorder %s21, 0
    %p236 = por %p234, %p235
    %p237 = scmp.ne.s32.totalorder %s225, %s226
    %p238 = scmp.eq.s32.totalorder %s22, 1
    %p239 = por %p237, %p238
    %p241 = scmp.ne.s32.totalorder %s226, %s240
    %p242 = scmp.eq.s32.totalorder %s22, 0
    %p243 = por %p241, %p242
    %s244 = ssub.s32 %s16, %s23
    %p245 = scmp.eq.s32.totalorder %s244, 0
    %s247 = sadd.s32 %s246, 1
    %s248 = scalar_select %p245, %s246, %s247
    %p251 = pneg %p245
    %p252 = scmp.eq.s32.totalorder %s16, 1
    %p253 = por %p251, %p252
    %p254 = scmp.ne.s32.totalorder %s246, %s249
    %p255 = scmp.eq.s32.totalorder %s16, 0
    %p256 = por %p254, %p255
    %p257 = scmp.ne.s32.totalorder %s246, %s249
    %p258 = scmp.eq.s32.totalorder %s21, 1
    %p259 = por %p257, %p258
    %p260 = scmp.ne.s32.totalorder %s249, %s250
    %p261 = scmp.eq.s32.totalorder %s21, 0
    %p262 = por %p260, %p261
    %p263 = scmp.ne.s32.totalorder %s249, %s250
    %p264 = scmp.eq.s32.totalorder %s22, 1
    %p265 = por %p263, %p264
    %p267 = scmp.ne.s32.totalorder %s250, %s266
    %p268 = scmp.eq.s32.totalorder %s22, 0
    %p269 = por %p267, %p268
    %p270 = scmp.le.s32.totalorder 1, %s16
    %p271 = scmp.lt.s32.totalorder %s16, 3
    %p272 = pnand %p270, %p271
    %p273 = pneg %p272
    // Predicated region
    $region9: #{vae_forward.1} parent=5 // pred_check
      _
    $region10: #{vae_forward.1} parent=5 // pred_check_branch
      %275 = sbr.rel (%p272) target = $region12
    $region11: #{vae_forward.1} parent=5 // pred_region
      %s276 = ssub.s32 %s16, 1
      // Predicated region
      $region13: #{vae_forward.1} parent=11 // pred_check
        %p277 = pneg %p89
      $region14: #{vae_forward.1} parent=11 // pred_check_branch
        %279 = sbr.rel (%p277) target = $region16
      $region15: #{vae_forward.1} parent=11 // pred_region
        _
      $region16: #{vae_forward.1} parent=11 // pred_fallthru
        _
      // Predicated region
      $region17: #{vae_forward.1} parent=11 // pred_check
        %p280 = pneg %p110
      $region18: #{vae_forward.1} parent=11 // pred_check_branch
        %282 = sbr.rel (%p280) target = $region20
      $region19: #{vae_forward.1} parent=11 // pred_region
        _
      $region20: #{vae_forward.1} parent=11 // pred_fallthru
        _
      // Predicated region
      $region21: #{vae_forward.1} parent=11 // pred_check
        %p283 = pneg %p131
      $region22: #{vae_forward.1} parent=11 // pred_check_branch
        %285 = sbr.rel (%p283) target = $region24
      $region23: #{vae_forward.1} parent=11 // pred_region
        _
      $region24: #{vae_forward.1} parent=11 // pred_fallthru
        _
      // Predicated region
      $region25: #{vae_forward.1} parent=11 // pred_check
        %p286 = pneg %p152
      $region26: #{vae_forward.1} parent=11 // pred_check_branch
        %288 = sbr.rel (%p286) target = $region28
      $region27: #{vae_forward.1} parent=11 // pred_region
        _
      $region28: #{vae_forward.1} parent=11 // pred_fallthru
        _
      // Predicated region
      $region29: #{vae_forward.1} parent=11 // pred_check
        %p289 = pneg %p173
      $region30: #{vae_forward.1} parent=11 // pred_check_branch
        %291 = sbr.rel (%p289) target = $region32
      $region31: #{vae_forward.1} parent=11 // pred_region
        _
      $region32: #{vae_forward.1} parent=11 // pred_fallthru
        _
      // Predicated region
      $region33: #{vae_forward.1} parent=11 // pred_check
        %p292 = pneg %p194
      $region34: #{vae_forward.1} parent=11 // pred_check_branch
        %294 = sbr.rel (%p292) target = $region36
      $region35: #{vae_forward.1} parent=11 // pred_region
        _
      $region36: #{vae_forward.1} parent=11 // pred_fallthru
        _
      // Predicated region
      $region37: #{vae_forward.1} parent=11 // pred_check
        %p295 = pneg %p215
      $region38: #{vae_forward.1} parent=11 // pred_check_branch
        %297 = sbr.rel (%p295) target = $region40
      $region39: #{vae_forward.1} parent=11 // pred_region
        _
      $region40: #{vae_forward.1} parent=11 // pred_fallthru
        _
      // Predicated region
      $region41: #{vae_forward.1} parent=11 // pred_check
        %p298 = pneg %p236
      $region42: #{vae_forward.1} parent=11 // pred_check_branch
        %300 = sbr.rel (%p298) target = $region44
      $region43: #{vae_forward.1} parent=11 // pred_region
        _
      $region44: #{vae_forward.1} parent=11 // pred_fallthru
        _
    $region12: #{vae_forward.1} parent=5 // pred_fallthru
      _
    %p301 = scmp.lt.s32.totalorder %s16, 2
    // Predicated region
    $region45: #{vae_forward.1} parent=5 // pred_check
      %p302 = pneg %p301
    $region46: #{vae_forward.1} parent=5 // pred_check_branch
      %304 = sbr.rel (%p302) target = $region48
    $region47: #{vae_forward.1} parent=5 // pred_region
      // Predicated region
      $region49: #{vae_forward.1} parent=47 // pred_check
        %p305 = pneg %p36
      $region50: #{vae_forward.1} parent=47 // pred_check_branch
        %307 = sbr.rel (%p305) target = $region52
      $region51: #{vae_forward.1} parent=47 // pred_region
        %s308 = smul.u32 16, %s16
        %p309 = scmp.lt.s32.totalorder %s308, 31
        %s310 = scalar_select %p309, %s308, 31
        %s311 = smul.addr %s310, 8
        %s312 = scalar_lea.vmem %s0, %s311
        %s313 = smul.u32 16, %s16
      $region52: #{vae_forward.1} parent=47 // pred_fallthru
        _
      // Predicated region
      $region53: #{vae_forward.1} parent=47 // pred_check
        %p314 = pneg %p62
      $region54: #{vae_forward.1} parent=47 // pred_check_branch
        %316 = sbr.rel (%p314) target = $region56
      $region55: #{vae_forward.1} parent=47 // pred_region
        %s317 = smul.u32 16, %s16
        %p318 = scmp.lt.s32.totalorder %s317, 31
        %s319 = scalar_select %p318, %s317, 31
        %s320 = smul.addr %s319, 8
        %s321 = scalar_lea.vmem %s1, %s320
        %s322 = smul.u32 16, %s16
      $region56: #{vae_forward.1} parent=47 // pred_fallthru
        _
    $region48: #{vae_forward.1} parent=5 // pred_fallthru
      _
    %p323 = scmp.le.s32.totalorder 1, %s16
    %p324 = scmp.lt.s32.totalorder %s16, 3
    %p325 = pnand %p323, %p324
    %p326 = pneg %p325
    // Predicated region
    $region57: #{vae_forward.1} parent=5 // pred_check
      _
    $region58: #{vae_forward.1} parent=5 // pred_check_branch
      %328 = sbr.rel (%p325) target = $region60
    $region59: #{vae_forward.1} parent=5 // pred_region
      %s329 = ssub.s32 %s16, 1
      %s330 = smul.u32 16, %s21
      %p331 = scmp.lt.s32.totalorder %s330, 31
      %s332 = scalar_select %p331, %s330, 31
      %s333 = smul.addr %s332, 8
      %s334 = scalar_lea.vmem %s0, %s333
      %p335 = pneg %p42
      %p336 = pneg %p39
      %s337 = smul.u32 16, %s21
      %p338 = scmp.lt.s32.totalorder %s337, 31
      %s339 = scalar_select %p338, %s337, 31
      %s340 = smul.addr %s339, 8
      %s341 = scalar_lea.vmem %s1, %s340
      %p342 = pneg %p68
      %p343 = pneg %p65
      %p344 = pneg %p89
      %p345 = pneg %p86
      %p346 = pneg %p110
      %p347 = pneg %p107
      %p348 = pneg %p131
      %p349 = pneg %p128
      %p350 = pneg %p152
      %p351 = pneg %p149
      %p352 = pneg %p173
      %p353 = pneg %p170
      %p354 = pneg %p194
      %p355 = pneg %p191
      %p356 = pneg %p215
      %p357 = pneg %p212
      %p358 = pneg %p236
      %p359 = pneg %p233
      %p360 = pneg %p262
      %p361 = pneg %p259
      %s362 = smul.u32 16, %s21
      %p363 = scmp.lt.s32.totalorder %s362, 31
      %s364 = scalar_select %p363, %s362, 31
      %s365 = smul.addr %s364, 8
      %s366 = scalar_lea.vmem %s10, %s365
      %s367 = smul.u32 16, %s21
      %p368 = scmp.lt.s32.totalorder %s367, 31
      %s369 = scalar_select %p368, %s367, 31
      %s370 = smul.addr %s369, 8
      %s371 = scalar_lea.vmem %s0, %s370
      %s372 = smul.u32 16, %s21
      %s373 = smul.u32 16, %s21
      %p374 = scmp.lt.s32.totalorder %s373, 31
      %s375 = scalar_select %p374, %s373, 31
      %s376 = smul.addr %s375, 8
      %s377 = scalar_lea.vmem %s1, %s376
      %s378 = smul.u32 16, %s21
      %s379 = smul.u32 16, %s21
      %p380 = scmp.lt.s32.totalorder %s379, 31
      %s381 = scalar_select %p380, %s379, 31
      %s382 = smul.addr %s381, 8
      %s383 = scalar_lea.vmem %s10, %s382
      %s384 = smul.u32 16, %s21
      %v385 = vld [vmem:[%s371] sm:$0xff]
      %v386 = vld [vmem:[%s371 + $0x8] sm:$0xff]
      %v387 = vld [vmem:[%s371 + $0x10] sm:$0xff]
      %v388 = vld [vmem:[%s371 + $0x18] sm:$0xff]
      %v389 = vld [vmem:[%s371 + $0x20] sm:$0xff]
      %v390 = vld [vmem:[%s371 + $0x28] sm:$0xff]
      %v391 = vld [vmem:[%s371 + $0x30] sm:$0xff]
      %v392 = vld [vmem:[%s371 + $0x38] sm:$0xff]
      %v393 = vld [vmem:[%s371 + $0x40] sm:$0xff]
      %v394 = vld [vmem:[%s371 + $0x48] sm:$0xff]
      %v395 = vld [vmem:[%s371 + $0x50] sm:$0xff]
      %v396 = vld [vmem:[%s371 + $0x58] sm:$0xff]
      %v397 = vld [vmem:[%s371 + $0x60] sm:$0xff]
      %v398 = vld [vmem:[%s371 + $0x68] sm:$0xff]
      %v399 = vld [vmem:[%s371 + $0x70] sm:$0xff]
      %v400 = vld [vmem:[%s371 + $0x78] sm:$0xff]
      %v401 = vld [vmem:[%s2] sm:$0xff]
      %v402 = vld [vmem:[%s2 + $0x8] sm:$0xff]
      %v403 = vld [vmem:[%s2 + $0x10] sm:$0xff]
      %v404 = vld [vmem:[%s2 + $0x18] sm:$0xff]
      %v405 = vld [vmem:[%s2 + $0x20] sm:$0xff]
      %v406 = vld [vmem:[%s2 + $0x28] sm:$0xff]
      %v407 = vld [vmem:[%s2 + $0x30] sm:$0xff]
      %v408 = vld [vmem:[%s2 + $0x38] sm:$0xff]
      %v409 = vld [vmem:[%s3] sm:$0x1]
      %v411 = vlaneseq
      %v412 = vshrl.u32 %v411, 7
      %v413 = vsub.s32 0, %v412
      %v414 = vrot.slane %v409, %v413
      %vm416 = vcmask 523264
      %v418 = vsel %vm416, %v385, 0
      %v421 = vsel %vm416, %v386, 0
      %v424 = vsel %vm416, %v387, 0
      %v427 = vsel %vm416, %v388, 0
      %v430 = vsel %vm416, %v389, 0
      %v433 = vsel %vm416, %v390, 0
      %v436 = vsel %vm416, %v391, 0
      %v439 = vsel %vm416, %v392, 0
      %v442 = vsel %vm416, %v393, 0
      %v445 = vsel %vm416, %v394, 0
      %v448 = vsel %vm416, %v395, 0
      %v451 = vsel %vm416, %v396, 0
      %v454 = vsel %vm416, %v397, 0
      %v457 = vsel %vm416, %v398, 0
      %v460 = vsel %vm416, %v399, 0
      %v463 = vsel %vm416, %v400, 0
      %465 = vmatprep.subr.mxu0 0.0
      %466 = vmatpush1.msra.mxu0 %v401
      %467 = vmatprep.subr.mxu0 0.0
      %468 = vmatpush1.msra.mxu0 %v402
      %469 = vmatprep.subr.mxu0 0.0
      %470 = vmatpush1.msra.mxu0 %v403
      %471 = vmatprep.subr.mxu0 0.0
      %472 = vmatpush1.msra.mxu0 %v404
      %473 = vmatprep.subr.mxu0 0.0
      %474 = vmatpush1.msra.mxu0 %v405
      %475 = vmatprep.subr.mxu0 0.0
      %476 = vmatpush1.msra.mxu0 %v406
      %477 = vmatprep.subr.mxu0 0.0
      %478 = vmatpush1.msra.mxu0 %v407
      %479 = vmatprep.subr.mxu0 0.0
      %480 = vmatpush1.msra.mxu0 %v408
      %481 = vmatprep.subr.mxu0 0.0
      %482 = vmatpush1.msra.mxu0 0.0
      %483 = vmatprep.subr.mxu0 0.0
      %484 = vmatpush1.msra.mxu0 0.0
      %485 = vmatprep.subr.mxu0 0.0
      %486 = vmatpush1.msra.mxu0 0.0
      %487 = vmatprep.subr.mxu0 0.0
      %488 = vmatpush1.msra.mxu0 0.0
      %489 = vmatprep.subr.mxu0 0.0
      %490 = vmatpush1.msra.mxu0 0.0
      %491 = vmatprep.subr.mxu0 0.0
      %492 = vmatpush1.msra.mxu0 0.0
      %493 = vmatprep.subr.mxu0 0.0
      %494 = vmatpush1.msra.mxu0 0.0
      %495 = vmatprep.subr.mxu0 0.0
      %496 = vmatpush1.msra.mxu0 0.0
      %497 = vmatprep.subr.mxu0 0.0
      %498 = vmatpush1.msra.mxu0 0.0
      %499 = vmatprep.subr.mxu0 0.0
      %500 = vmatpush1.msra.mxu0 0.0
      %501 = vmatprep.subr.mxu0 0.0
      %502 = vmatpush1.msra.mxu0 0.0
      %503 = vmatprep.subr.mxu0 0.0
      %504 = vmatpush1.msra.mxu0 0.0
      %505 = vmatprep.subr.mxu0 0.0
      %506 = vmatpush1.msra.mxu0 0.0
      %507 = vmatprep.subr.mxu0 0.0
      %508 = vmatpush1.msra.mxu0 0.0
      %509 = vmatprep.subr.mxu0 0.0
      %510 = vmatpush1.msra.mxu0 0.0
      %511 = vmatprep.subr.mxu0 0.0
      %512 = vmatpush1.msra.mxu0 0.0
      %513 = vmatprep.subr.mxu0 0.0
      %514 = vmatpush1.msra.mxu0 0.0
      %515 = vmatprep.subr.mxu0 0.0
      %516 = vmatpush1.msra.mxu0 0.0
      %517 = vmatprep.subr.mxu0 0.0
      %518 = vmatpush1.msra.mxu0 0.0
      %519 = vmatprep.subr.mxu0 0.0
      %520 = vmatpush1.msra.mxu0 0.0
      %521 = vmatprep.subr.mxu0 0.0
      %522 = vmatpush1.msra.mxu0 0.0
      %523 = vmatprep.subr.mxu0 0.0
      %524 = vmatpush1.msra.mxu0 0.0
      %525 = vmatprep.subr.mxu0 0.0
      %526 = vmatpush1.msra.mxu0 0.0
      %527 = vmatprep.subr.mxu0 0.0
      %528 = vmatpush1.msra.mxu0 0.0
      %529 = vmatprep.mubr.f32.mxu0 0.0
      %530 = vmatmul.mubr.f32.gmra.mrb[0].mxu0 %v418
      %v531 = vpop.f32.mrb[0].mxu0
      %v532 = vadd.f32 %v414, %v531
      %v533 = vpop.f32.mrb[0].mxu0
      %534 = vmatprep.mubr.f32.mxu0 0.0
      %535 = vmatmul.mubr.f32.gmra.mrb[0].mxu0 %v421
      %v536 = vpop.f32.mrb[0].mxu0
      %v537 = vadd.f32 %v414, %v536
      %v538 = vpop.f32.mrb[0].mxu0
      %539 = vmatprep.mubr.f32.mxu0 0.0
      %540 = vmatmul.mubr.f32.gmra.mrb[0].mxu0 %v424
      %v541 = vpop.f32.mrb[0].mxu0
      %v542 = vadd.f32 %v414, %v541
      %v543 = vpop.f32.mrb[0].mxu0
      %544 = vmatprep.mubr.f32.mxu0 0.0
      %545 = vmatmul.mubr.f32.gmra.mrb[0].mxu0 %v427
      %v546 = vpop.f32.mrb[0].mxu0
      %v547 = vadd.f32 %v414, %v546
      %v548 = vpop.f32.mrb[0].mxu0
      %549 = vmatprep.mubr.f32.mxu0 0.0
      %550 = vmatmul.mubr.f32.gmra.mrb[0].mxu0 %v430
      %v551 = vpop.f32.mrb[0].mxu0
      %v552 = vadd.f32 %v414, %v551
      %v553 = vpop.f32.mrb[0].mxu0
      %554 = vmatprep.mubr.f32.mxu0 0.0
      %555 = vmatmul.mubr.f32.gmra.mrb[0].mxu0 %v433
      %v556 = vpop.f32.mrb[0].mxu0
      %v557 = vadd.f32 %v414, %v556
      %v558 = vpop.f32.mrb[0].mxu0
      %559 = vmatprep.mubr.f32.mxu0 0.0
      %560 = vmatmul.mubr.f32.gmra.mrb[0].mxu0 %v436
      %v561 = vpop.f32.mrb[0].mxu0
      %v562 = vadd.f32 %v414, %v561
      %v563 = vpop.f32.mrb[0].mxu0
      %564 = vmatprep.mubr.f32.mxu0 0.0
      %565 = vmatmul.mubr.f32.gmra.mrb[0].mxu0 %v439
      %v566 = vpop.f32.mrb[0].mxu0
      %v567 = vadd.f32 %v414, %v566
      %v568 = vpop.f32.mrb[0].mxu0
      %569 = vmatprep.mubr.f32.mxu0 0.0
      %570 = vmatmul.mubr.f32.gmra.mrb[0].mxu0 %v442
      %v571 = vpop.f32.mrb[0].mxu0
      %v572 = vadd.f32 %v414, %v571
      %v573 = vpop.f32.mrb[0].mxu0
      %574 = vmatprep.mubr.f32.mxu0 0.0
      %575 = vmatmul.mubr.f32.gmra.mrb[0].mxu0 %v445
      %v576 = vpop.f32.mrb[0].mxu0
      %v577 = vadd.f32 %v414, %v576
      %v578 = vpop.f32.mrb[0].mxu0
      %579 = vmatprep.mubr.f32.mxu0 0.0
      %580 = vmatmul.mubr.f32.gmra.mrb[0].mxu0 %v448
      %v581 = vpop.f32.mrb[0].mxu0
      %v582 = vadd.f32 %v414, %v581
      %v583 = vpop.f32.mrb[0].mxu0
      %584 = vmatprep.mubr.f32.mxu0 0.0
      %585 = vmatmul.mubr.f32.gmra.mrb[0].mxu0 %v451
      %v586 = vpop.f32.mrb[0].mxu0
      %v587 = vadd.f32 %v414, %v586
      %v588 = vpop.f32.mrb[0].mxu0
      %589 = vmatprep.mubr.f32.mxu0 0.0
      %590 = vmatmul.mubr.f32.gmra.mrb[0].mxu0 %v454
      %v591 = vpop.f32.mrb[0].mxu0
      %v592 = vadd.f32 %v414, %v591
      %v593 = vpop.f32.mrb[0].mxu0
      %594 = vmatprep.mubr.f32.mxu0 0.0
      %595 = vmatmul.mubr.f32.gmra.mrb[0].mxu0 %v457
      %v596 = vpop.f32.mrb[0].mxu0
      %v597 = vadd.f32 %v414, %v596
      %v598 = vpop.f32.mrb[0].mxu0
      %599 = vmatprep.mubr.f32.mxu0 0.0
      %600 = vmatmul.mubr.f32.gmra.mrb[0].mxu0 %v460
      %v601 = vpop.f32.mrb[0].mxu0
      %v602 = vadd.f32 %v414, %v601
      %v603 = vpop.f32.mrb[0].mxu0
      %604 = vmatprep.mubr.f32.mxu0 0.0
      %605 = vmatmul.mubr.f32.gmra.mrb[0].mxu0 %v463
      %v606 = vpop.f32.mrb[0].mxu0
      %v607 = vadd.f32 %v414, %v606
      %v608 = vpop.f32.mrb[0].mxu0
      %609 = vdwg.mxu0
      %v610 = vmax.f32 %v532, 0.0
      %v611 = vmax.f32 %v537, 0.0
      %v612 = vmax.f32 %v542, 0.0
      %v613 = vmax.f32 %v547, 0.0
      %v614 = vmax.f32 %v552, 0.0
      %v615 = vmax.f32 %v557, 0.0
      %v616 = vmax.f32 %v562, 0.0
      %v617 = vmax.f32 %v567, 0.0
      %v618 = vmax.f32 %v572, 0.0
      %v619 = vmax.f32 %v577, 0.0
      %v620 = vmax.f32 %v582, 0.0
      %v621 = vmax.f32 %v587, 0.0
      %v622 = vmax.f32 %v592, 0.0
      %v623 = vmax.f32 %v597, 0.0
      %v624 = vmax.f32 %v602, 0.0
      %v625 = vmax.f32 %v607, 0.0
      %v626 = vld [vmem:[%s4] sm:$0xff]
      %v627 = vld [vmem:[%s4 + $0x8] sm:$0xff]
      %v628 = vld [vmem:[%s4 + $0x10] sm:$0xff]
      %v629 = vld [vmem:[%s4 + $0x18] sm:$0xff]
      %v630 = vld [vmem:[%s5] sm:$0x1]
      %v632 = vlaneseq
      %v633 = vshrl.u32 %v632, 7
      %v634 = vsub.s32 0, %v633
      %v635 = vrot.slane %v630, %v634
      %vm637 = vcmask 261120
      %v639 = vsel %vm637, %v610, 0
      %v642 = vsel %vm637, %v611, 0
      %v645 = vsel %vm637, %v612, 0
      %v648 = vsel %vm637, %v613, 0
      %v651 = vsel %vm637, %v614, 0
      %v654 = vsel %vm637, %v615, 0
      %v657 = vsel %vm637, %v616, 0
      %v660 = vsel %vm637, %v617, 0
      %v663 = vsel %vm637, %v618, 0
      %v666 = vsel %vm637, %v619, 0
      %v669 = vsel %vm637, %v620, 0
      %v672 = vsel %vm637, %v621, 0
      %v675 = vsel %vm637, %v622, 0
      %v678 = vsel %vm637, %v623, 0
      %v681 = vsel %vm637, %v624, 0
      %v684 = vsel %vm637, %v625, 0
      %686 = vmatprep.subr.mxu0 0.0
      %687 = vmatpush1.msra.mxu0 %v626
      %688 = vmatprep.subr.mxu0 0.0
      %689 = vmatpush1.msra.mxu0 %v627
      %690 = vmatprep.subr.mxu0 0.0
      %691 = vmatpush1.msra.mxu0 %v628
      %692 = vmatprep.subr.mxu0 0.0
      %693 = vmatpush1.msra.mxu0 %v629
      %694 = vmatprep.subr.mxu0 0.0
      %695 = vmatpush1.msra.mxu0 0.0
      %696 = vmatprep.subr.mxu0 0.0
      %697 = vmatpush1.msra.mxu0 0.0
      %698 = vmatprep.subr.mxu0 0.0
      %699 = vmatpush1.msra.mxu0 0.0
      %700 = vmatprep.subr.mxu0 0.0
      %701 = vmatpush1.msra.mxu0 0.0
      %702 = vmatprep.subr.mxu0 0.0
      %703 = vmatpush1.msra.mxu0 0.0
      %704 = vmatprep.subr.mxu0 0.0
      %705 = vmatpush1.msra.mxu0 0.0
      %706 = vmatprep.subr.mxu0 0.0
      %707 = vmatpush1.msra.mxu0 0.0
      %708 = vmatprep.subr.mxu0 0.0
      %709 = vmatpush1.msra.mxu0 0.0
      %710 = vmatprep.subr.mxu0 0.0
      %711 = vmatpush1.msra.mxu0 0.0
      %712 = vmatprep.subr.mxu0 0.0
      %713 = vmatpush1.msra.mxu0 0.0
      %714 = vmatprep.subr.mxu0 0.0
      %715 = vmatpush1.msra.mxu0 0.0
      %716 = vmatprep.subr.mxu0 0.0
      %717 = vmatpush1.msra.mxu0 0.0
      %718 = vmatprep.subr.mxu0 0.0
      %719 = vmatpush1.msra.mxu0 0.0
      %720 = vmatprep.subr.mxu0 0.0
      %721 = vmatpush1.msra.mxu0 0.0
      %722 = vmatprep.subr.mxu0 0.0
      %723 = vmatpush1.msra.mxu0 0.0
      %724 = vmatprep.subr.mxu0 0.0
      %725 = vmatpush1.msra.mxu0 0.0
      %726 = vmatprep.subr.mxu0 0.0
      %727 = vmatpush1.msra.mxu0 0.0
      %728 = vmatprep.subr.mxu0 0.0
      %729 = vmatpush1.msra.mxu0 0.0
      %730 = vmatprep.subr.mxu0 0.0
      %731 = vmatpush1.msra.mxu0 0.0
      %732 = vmatprep.subr.mxu0 0.0
      %733 = vmatpush1.msra.mxu0 0.0
      %734 = vmatprep.subr.mxu0 0.0
      %735 = vmatpush1.msra.mxu0 0.0
      %736 = vmatprep.subr.mxu0 0.0
      %737 = vmatpush1.msra.mxu0 0.0
      %738 = vmatprep.subr.mxu0 0.0
      %739 = vmatpush1.msra.mxu0 0.0
      %740 = vmatprep.subr.mxu0 0.0
      %741 = vmatpush1.msra.mxu0 0.0
      %742 = vmatprep.subr.mxu0 0.0
      %743 = vmatpush1.msra.mxu0 0.0
      %744 = vmatprep.subr.mxu0 0.0
      %745 = vmatpush1.msra.mxu0 0.0
      %746 = vmatprep.subr.mxu0 0.0
      %747 = vmatpush1.msra.mxu0 0.0
      %748 = vmatprep.subr.mxu0 0.0
      %749 = vmatpush1.msra.mxu0 0.0
      %750 = vmatprep.mubr.f32.mxu0 0.0
      %751 = vmatmul.mubr.f32.gmra.mrb[0].mxu0 %v639
      %v752 = vpop.f32.mrb[0].mxu0
      %v753 = vadd.f32 %v635, %v752
      %v754 = vpop.f32.mrb[0].mxu0
      %755 = vmatprep.mubr.f32.mxu0 0.0
      %756 = vmatmul.mubr.f32.gmra.mrb[0].mxu0 %v642
      %v757 = vpop.f32.mrb[0].mxu0
      %v758 = vadd.f32 %v635, %v757
      %v759 = vpop.f32.mrb[0].mxu0
      %760 = vmatprep.mubr.f32.mxu0 0.0
      %761 = vmatmul.mubr.f32.gmra.mrb[0].mxu0 %v645
      %v762 = vpop.f32.mrb[0].mxu0
      %v763 = vadd.f32 %v635, %v762
      %v764 = vpop.f32.mrb[0].mxu0
      %765 = vmatprep.mubr.f32.mxu0 0.0
      %766 = vmatmul.mubr.f32.gmra.mrb[0].mxu0 %v648
      %v767 = vpop.f32.mrb[0].mxu0
      %v768 = vadd.f32 %v635, %v767
      %v769 = vpop.f32.mrb[0].mxu0
      %770 = vmatprep.mubr.f32.mxu0 0.0
      %771 = vmatmul.mubr.f32.gmra.mrb[0].mxu0 %v651
      %v772 = vpop.f32.mrb[0].mxu0
      %v773 = vadd.f32 %v635, %v772
      %v774 = vpop.f32.mrb[0].mxu0
      %775 = vmatprep.mubr.f32.mxu0 0.0
      %776 = vmatmul.mubr.f32.gmra.mrb[0].mxu0 %v654
      %v777 = vpop.f32.mrb[0].mxu0
      %v778 = vadd.f32 %v635, %v777
      %v779 = vpop.f32.mrb[0].mxu0
      %780 = vmatprep.mubr.f32.mxu0 0.0
      %781 = vmatmul.mubr.f32.gmra.mrb[0].mxu0 %v657
      %v782 = vpop.f32.mrb[0].mxu0
      %v783 = vadd.f32 %v635, %v782
      %v784 = vpop.f32.mrb[0].mxu0
      %785 = vmatprep.mubr.f32.mxu0 0.0
      %786 = vmatmul.mubr.f32.gmra.mrb[0].mxu0 %v660
      %v787 = vpop.f32.mrb[0].mxu0
      %v788 = vadd.f32 %v635, %v787
      %v789 = vpop.f32.mrb[0].mxu0
      %790 = vmatprep.mubr.f32.mxu0 0.0
      %791 = vmatmul.mubr.f32.gmra.mrb[0].mxu0 %v663
      %v792 = vpop.f32.mrb[0].mxu0
      %v793 = vadd.f32 %v635, %v792
      %v794 = vpop.f32.mrb[0].mxu0
      %795 = vmatprep.mubr.f32.mxu0 0.0
      %796 = vmatmul.mubr.f32.gmra.mrb[0].mxu0 %v666
      %v797 = vpop.f32.mrb[0].mxu0
      %v798 = vadd.f32 %v635, %v797
      %v799 = vpop.f32.mrb[0].mxu0
      %800 = vmatprep.mubr.f32.mxu0 0.0
      %801 = vmatmul.mubr.f32.gmra.mrb[0].mxu0 %v669
      %v802 = vpop.f32.mrb[0].mxu0
      %v803 = vadd.f32 %v635, %v802
      %v804 = vpop.f32.mrb[0].mxu0
      %805 = vmatprep.mubr.f32.mxu0 0.0
      %806 = vmatmul.mubr.f32.gmra.mrb[0].mxu0 %v672
      %v807 = vpop.f32.mrb[0].mxu0
      %v808 = vadd.f32 %v635, %v807
      %v809 = vpop.f32.mrb[0].mxu0
      %810 = vmatprep.mubr.f32.mxu0 0.0
      %811 = vmatmul.mubr.f32.gmra.mrb[0].mxu0 %v675
      %v812 = vpop.f32.mrb[0].mxu0
      %v813 = vadd.f32 %v635, %v812
      %v814 = vpop.f32.mrb[0].mxu0
      %815 = vmatprep.mubr.f32.mxu0 0.0
      %816 = vmatmul.mubr.f32.gmra.mrb[0].mxu0 %v678
      %v817 = vpop.f32.mrb[0].mxu0
      %v818 = vadd.f32 %v635, %v817
      %v819 = vpop.f32.mrb[0].mxu0
      %820 = vmatprep.mubr.f32.mxu0 0.0
      %821 = vmatmul.mubr.f32.gmra.mrb[0].mxu0 %v681
      %v822 = vpop.f32.mrb[0].mxu0
      %v823 = vadd.f32 %v635, %v822
      %v824 = vpop.f32.mrb[0].mxu0
      %825 = vmatprep.mubr.f32.mxu0 0.0
      %826 = vmatmul.mubr.f32.gmra.mrb[0].mxu0 %v684
      %v827 = vpop.f32.mrb[0].mxu0
      %v828 = vadd.f32 %v635, %v827
      %v829 = vpop.f32.mrb[0].mxu0
      %830 = vdwg.mxu0
      %v831 = vld [vmem:[%s377] sm:$0xff]
      %v832 = vld [vmem:[%s377 + $0x8] sm:$0xff]
      %v833 = vld [vmem:[%s377 + $0x10] sm:$0xff]
      %v834 = vld [vmem:[%s377 + $0x18] sm:$0xff]
      %v835 = vld [vmem:[%s377 + $0x20] sm:$0xff]
      %v836 = vld [vmem:[%s377 + $0x28] sm:$0xff]
      %v837 = vld [vmem:[%s377 + $0x30] sm:$0xff]
      %v838 = vld [vmem:[%s377 + $0x38] sm:$0xff]
      %v839 = vld [vmem:[%s377 + $0x40] sm:$0xff]
      %v840 = vld [vmem:[%s377 + $0x48] sm:$0xff]
      %v841 = vld [vmem:[%s377 + $0x50] sm:$0xff]
      %v842 = vld [vmem:[%s377 + $0x58] sm:$0xff]
      %v843 = vld [vmem:[%s377 + $0x60] sm:$0xff]
      %v844 = vld [vmem:[%s377 + $0x68] sm:$0xff]
      %v845 = vld [vmem:[%s377 + $0x70] sm:$0xff]
      %v846 = vld [vmem:[%s377 + $0x78] sm:$0xff]
      %v847 = vmul.f32 %v753, 0.5
      %v848 = vmul.f32 %v758, 0.5
      %v849 = vmul.f32 %v763, 0.5
      %v850 = vmul.f32 %v768, 0.5
      %v851 = vmul.f32 %v773, 0.5
      %v852 = vmul.f32 %v778, 0.5
      %v853 = vmul.f32 %v783, 0.5
      %v854 = vmul.f32 %v788, 0.5
      %v855 = vmul.f32 %v793, 0.5
      %v856 = vmul.f32 %v798, 0.5
      %v857 = vmul.f32 %v803, 0.5
      %v858 = vmul.f32 %v808, 0.5
      %v859 = vmul.f32 %v813, 0.5
      %v860 = vmul.f32 %v818, 0.5
      %v861 = vmul.f32 %v823, 0.5
      %v862 = vmul.f32 %v828, 0.5
      %v863 = vmul.f32 %v847, 1.442695
      %v864 = vpow.pop %v863
      %v865 = vmul.f32 %v848, 1.442695
      %v866 = vpow.pop %v865
      %v867 = vmul.f32 %v849, 1.442695
      %v868 = vpow.pop %v867
      %v869 = vmul.f32 %v850, 1.442695
      %v870 = vpow.pop %v869
      %v871 = vmul.f32 %v851, 1.442695
      %v872 = vpow.pop %v871
      %v873 = vmul.f32 %v852, 1.442695
      %v874 = vpow.pop %v873
      %v875 = vmul.f32 %v853, 1.442695
      %v876 = vpow.pop %v875
      %v877 = vmul.f32 %v854, 1.442695
      %v878 = vpow.pop %v877
      %v879 = vmul.f32 %v855, 1.442695
      %v880 = vpow.pop %v879
      %v881 = vmul.f32 %v856, 1.442695
      %v882 = vpow.pop %v881
      %v883 = vmul.f32 %v857, 1.442695
      %v884 = vpow.pop %v883
      %v885 = vmul.f32 %v858, 1.442695
      %v886 = vpow.pop %v885
      %v887 = vmul.f32 %v859, 1.442695
      %v888 = vpow.pop %v887
      %v889 = vmul.f32 %v860, 1.442695
      %v890 = vpow.pop %v889
      %v891 = vmul.f32 %v861, 1.442695
      %v892 = vpow.pop %v891
      %v893 = vmul.f32 %v862, 1.442695
      %v894 = vpow.pop %v893
      %911 = vrot.lane.b32.xlu0 %v864, 112
      %v912 = vpop.permute.xlu0 %911
      %913 = vrot.lane.b32.xlu0 %v866, 112
      %v914 = vpop.permute.xlu0 %913
      %915 = vrot.lane.b32.xlu0 %v868, 112
      %v916 = vpop.permute.xlu0 %915
      %917 = vrot.lane.b32.xlu0 %v870, 112
      %v918 = vpop.permute.xlu0 %917
      %919 = vrot.lane.b32.xlu0 %v872, 112
      %v920 = vpop.permute.xlu0 %919
      %921 = vrot.lane.b32.xlu0 %v874, 112
      %v922 = vpop.permute.xlu0 %921
      %923 = vrot.lane.b32.xlu0 %v876, 112
      %v924 = vpop.permute.xlu0 %923
      %925 = vrot.lane.b32.xlu0 %v878, 112
      %v926 = vpop.permute.xlu0 %925
      %927 = vrot.lane.b32.xlu0 %v880, 112
      %v928 = vpop.permute.xlu0 %927
      %929 = vrot.lane.b32.xlu0 %v882, 112
      %v930 = vpop.permute.xlu0 %929
      %931 = vrot.lane.b32.xlu0 %v884, 112
      %v932 = vpop.permute.xlu0 %931
      %933 = vrot.lane.b32.xlu0 %v886, 112
      %v934 = vpop.permute.xlu0 %933
      %935 = vrot.lane.b32.xlu0 %v888, 112
      %v936 = vpop.permute.xlu0 %935
      %937 = vrot.lane.b32.xlu0 %v890, 112
      %v938 = vpop.permute.xlu0 %937
      %939 = vrot.lane.b32.xlu0 %v892, 112
      %v940 = vpop.permute.xlu0 %939
      %941 = vrot.lane.b32.xlu0 %v894, 112
      %v942 = vpop.permute.xlu0 %941
      %v959 = vmul.f32 %v831, %v912
      %v960 = vmul.f32 %v832, %v914
      %v961 = vmul.f32 %v833, %v916
      %v962 = vmul.f32 %v834, %v918
      %v963 = vmul.f32 %v835, %v920
      %v964 = vmul.f32 %v836, %v922
      %v965 = vmul.f32 %v837, %v924
      %v966 = vmul.f32 %v838, %v926
      %v967 = vmul.f32 %v839, %v928
      %v968 = vmul.f32 %v840, %v930
      %v969 = vmul.f32 %v841, %v932
      %v970 = vmul.f32 %v842, %v934
      %v971 = vmul.f32 %v843, %v936
      %v972 = vmul.f32 %v844, %v938
      %v973 = vmul.f32 %v845, %v940
      %v974 = vmul.f32 %v846, %v942
      %v975 = vadd.f32 %v959, %v753
      %v976 = vadd.f32 %v960, %v758
      %v977 = vadd.f32 %v961, %v763
      %v978 = vadd.f32 %v962, %v768
      %v979 = vadd.f32 %v963, %v773
      %v980 = vadd.f32 %v964, %v778
      %v981 = vadd.f32 %v965, %v783
      %v982 = vadd.f32 %v966, %v788
      %v983 = vadd.f32 %v967, %v793
      %v984 = vadd.f32 %v968, %v798
      %v985 = vadd.f32 %v969, %v803
      %v986 = vadd.f32 %v970, %v808
      %v987 = vadd.f32 %v971, %v813
      %v988 = vadd.f32 %v972, %v818
      %v989 = vadd.f32 %v973, %v823
      %v990 = vadd.f32 %v974, %v828
      %v991 = vld [vmem:[%s6] sm:$0xff]
      %v992 = vld [vmem:[%s6 + $0x8] sm:$0xff]
      %v993 = vld [vmem:[%s7] sm:$0x1]
      %v995 = vlaneseq
      %v996 = vshrl.u32 %v995, 7
      %v997 = vsub.s32 0, %v996
      %v998 = vrot.slane %v993, %v997
      %vm1000 = vcmask 130048
      %v1002 = vsel %vm1000, %v975, 0
      %v1005 = vsel %vm1000, %v976, 0
      %v1008 = vsel %vm1000, %v977, 0
      %v1011 = vsel %vm1000, %v978, 0
      %v1014 = vsel %vm1000, %v979, 0
      %v1017 = vsel %vm1000, %v980, 0
      %v1020 = vsel %vm1000, %v981, 0
      %v1023 = vsel %vm1000, %v982, 0
      %v1026 = vsel %vm1000, %v983, 0
      %v1029 = vsel %vm1000, %v984, 0
      %v1032 = vsel %vm1000, %v985, 0
      %v1035 = vsel %vm1000, %v986, 0
      %v1038 = vsel %vm1000, %v987, 0
      %v1041 = vsel %vm1000, %v988, 0
      %v1044 = vsel %vm1000, %v989, 0
      %v1047 = vsel %vm1000, %v990, 0
      %1049 = vmatprep.subr.mxu0 0.0
      %1050 = vmatpush1.msra.mxu0 %v991
      %1051 = vmatprep.subr.mxu0 0.0
      %1052 = vmatpush1.msra.mxu0 %v992
      %1053 = vmatprep.subr.mxu0 0.0
      %1054 = vmatpush1.msra.mxu0 0.0
      %1055 = vmatprep.subr.mxu0 0.0
      %1056 = vmatpush1.msra.mxu0 0.0
      %1057 = vmatprep.subr.mxu0 0.0
      %1058 = vmatpush1.msra.mxu0 0.0
      %1059 = vmatprep.subr.mxu0 0.0
      %1060 = vmatpush1.msra.mxu0 0.0
      %1061 = vmatprep.subr.mxu0 0.0
      %1062 = vmatpush1.msra.mxu0 0.0
      %1063 = vmatprep.subr.mxu0 0.0
      %1064 = vmatpush1.msra.mxu0 0.0
      %1065 = vmatprep.subr.mxu0 0.0
      %1066 = vmatpush1.msra.mxu0 0.0
      %1067 = vmatprep.subr.mxu0 0.0
      %1068 = vmatpush1.msra.mxu0 0.0
      %1069 = vmatprep.subr.mxu0 0.0
      %1070 = vmatpush1.msra.mxu0 0.0
      %1071 = vmatprep.subr.mxu0 0.0
      %1072 = vmatpush1.msra.mxu0 0.0
      %1073 = vmatprep.subr.mxu0 0.0
      %1074 = vmatpush1.msra.mxu0 0.0
      %1075 = vmatprep.subr.mxu0 0.0
      %1076 = vmatpush1.msra.mxu0 0.0
      %1077 = vmatprep.subr.mxu0 0.0
      %1078 = vmatpush1.msra.mxu0 0.0
      %1079 = vmatprep.subr.mxu0 0.0
      %1080 = vmatpush1.msra.mxu0 0.0
      %1081 = vmatprep.subr.mxu0 0.0
      %1082 = vmatpush1.msra.mxu0 0.0
      %1083 = vmatprep.subr.mxu0 0.0
      %1084 = vmatpush1.msra.mxu0 0.0
      %1085 = vmatprep.subr.mxu0 0.0
      %1086 = vmatpush1.msra.mxu0 0.0
      %1087 = vmatprep.subr.mxu0 0.0
      %1088 = vmatpush1.msra.mxu0 0.0
      %1089 = vmatprep.subr.mxu0 0.0
      %1090 = vmatpush1.msra.mxu0 0.0
      %1091 = vmatprep.subr.mxu0 0.0
      %1092 = vmatpush1.msra.mxu0 0.0
      %1093 = vmatprep.subr.mxu0 0.0
      %1094 = vmatpush1.msra.mxu0 0.0
      %1095 = vmatprep.subr.mxu0 0.0
      %1096 = vmatpush1.msra.mxu0 0.0
      %1097 = vmatprep.subr.mxu0 0.0
      %1098 = vmatpush1.msra.mxu0 0.0
      %1099 = vmatprep.subr.mxu0 0.0
      %1100 = vmatpush1.msra.mxu0 0.0
      %1101 = vmatprep.subr.mxu0 0.0
      %1102 = vmatpush1.msra.mxu0 0.0
      %1103 = vmatprep.subr.mxu0 0.0
      %1104 = vmatpush1.msra.mxu0 0.0
      %1105 = vmatprep.subr.mxu0 0.0
      %1106 = vmatpush1.msra.mxu0 0.0
      %1107 = vmatprep.subr.mxu0 0.0
      %1108 = vmatpush1.msra.mxu0 0.0
      %1109 = vmatprep.subr.mxu0 0.0
      %1110 = vmatpush1.msra.mxu0 0.0
      %1111 = vmatprep.subr.mxu0 0.0
      %1112 = vmatpush1.msra.mxu0 0.0
      %1113 = vmatprep.mubr.f32.mxu0 0.0
      %1114 = vmatmul.mubr.f32.gmra.mrb[0].mxu0 %v1002
      %v1115 = vpop.f32.mrb[0].mxu0
      %v1116 = vadd.f32 %v998, %v1115
      %v1117 = vpop.f32.mrb[0].mxu0
      %1118 = vmatprep.mubr.f32.mxu0 0.0
      %1119 = vmatmul.mubr.f32.gmra.mrb[0].mxu0 %v1005
      %v1120 = vpop.f32.mrb[0].mxu0
      %v1121 = vadd.f32 %v998, %v1120
      %v1122 = vpop.f32.mrb[0].mxu0
      %1123 = vmatprep.mubr.f32.mxu0 0.0
      %1124 = vmatmul.mubr.f32.gmra.mrb[0].mxu0 %v1008
      %v1125 = vpop.f32.mrb[0].mxu0
      %v1126 = vadd.f32 %v998, %v1125
      %v1127 = vpop.f32.mrb[0].mxu0
      %1128 = vmatprep.mubr.f32.mxu0 0.0
      %1129 = vmatmul.mubr.f32.gmra.mrb[0].mxu0 %v1011
      %v1130 = vpop.f32.mrb[0].mxu0
      %v1131 = vadd.f32 %v998, %v1130
      %v1132 = vpop.f32.mrb[0].mxu0
      %1133 = vmatprep.mubr.f32.mxu0 0.0
      %1134 = vmatmul.mubr.f32.gmra.mrb[0].mxu0 %v1014
      %v1135 = vpop.f32.mrb[0].mxu0
      %v1136 = vadd.f32 %v998, %v1135
      %v1137 = vpop.f32.mrb[0].mxu0
      %1138 = vmatprep.mubr.f32.mxu0 0.0
      %1139 = vmatmul.mubr.f32.gmra.mrb[0].mxu0 %v1017
      %v1140 = vpop.f32.mrb[0].mxu0
      %v1141 = vadd.f32 %v998, %v1140
      %v1142 = vpop.f32.mrb[0].mxu0
      %1143 = vmatprep.mubr.f32.mxu0 0.0
      %1144 = vmatmul.mubr.f32.gmra.mrb[0].mxu0 %v1020
      %v1145 = vpop.f32.mrb[0].mxu0
      %v1146 = vadd.f32 %v998, %v1145
      %v1147 = vpop.f32.mrb[0].mxu0
      %1148 = vmatprep.mubr.f32.mxu0 0.0
      %1149 = vmatmul.mubr.f32.gmra.mrb[0].mxu0 %v1023
      %v1150 = vpop.f32.mrb[0].mxu0
      %v1151 = vadd.f32 %v998, %v1150
      %v1152 = vpop.f32.mrb[0].mxu0
      %1153 = vmatprep.mubr.f32.mxu0 0.0
      %1154 = vmatmul.mubr.f32.gmra.mrb[0].mxu0 %v1026
      %v1155 = vpop.f32.mrb[0].mxu0
      %v1156 = vadd.f32 %v998, %v1155
      %v1157 = vpop.f32.mrb[0].mxu0
      %1158 = vmatprep.mubr.f32.mxu0 0.0
      %1159 = vmatmul.mubr.f32.gmra.mrb[0].mxu0 %v1029
      %v1160 = vpop.f32.mrb[0].mxu0
      %v1161 = vadd.f32 %v998, %v1160
      %v1162 = vpop.f32.mrb[0].mxu0
      %1163 = vmatprep.mubr.f32.mxu0 0.0
      %1164 = vmatmul.mubr.f32.gmra.mrb[0].mxu0 %v1032
      %v1165 = vpop.f32.mrb[0].mxu0
      %v1166 = vadd.f32 %v998, %v1165
      %v1167 = vpop.f32.mrb[0].mxu0
      %1168 = vmatprep.mubr.f32.mxu0 0.0
      %1169 = vmatmul.mubr.f32.gmra.mrb[0].mxu0 %v1035
      %v1170 = vpop.f32.mrb[0].mxu0
      %v1171 = vadd.f32 %v998, %v1170
      %v1172 = vpop.f32.mrb[0].mxu0
      %1173 = vmatprep.mubr.f32.mxu0 0.0
      %1174 = vmatmul.mubr.f32.gmra.mrb[0].mxu0 %v1038
      %v1175 = vpop.f32.mrb[0].mxu0
      %v1176 = vadd.f32 %v998, %v1175
      %v1177 = vpop.f32.mrb[0].mxu0
      %1178 = vmatprep.mubr.f32.mxu0 0.0
      %1179 = vmatmul.mubr.f32.gmra.mrb[0].mxu0 %v1041
      %v1180 = vpop.f32.mrb[0].mxu0
      %v1181 = vadd.f32 %v998, %v1180
      %v1182 = vpop.f32.mrb[0].mxu0
      %1183 = vmatprep.mubr.f32.mxu0 0.0
      %1184 = vmatmul.mubr.f32.gmra.mrb[0].mxu0 %v1044
      %v1185 = vpop.f32.mrb[0].mxu0
      %v1186 = vadd.f32 %v998, %v1185
      %v1187 = vpop.f32.mrb[0].mxu0
      %1188 = vmatprep.mubr.f32.mxu0 0.0
      %1189 = vmatmul.mubr.f32.gmra.mrb[0].mxu0 %v1047
      %v1190 = vpop.f32.mrb[0].mxu0
      %v1191 = vadd.f32 %v998, %v1190
      %v1192 = vpop.f32.mrb[0].mxu0
      %1193 = vdwg.mxu0
      %v1194 = vmax.f32 %v1116, 0.0
      %v1195 = vmax.f32 %v1121, 0.0
      %v1196 = vmax.f32 %v1126, 0.0
      %v1197 = vmax.f32 %v1131, 0.0
      %v1198 = vmax.f32 %v1136, 0.0
      %v1199 = vmax.f32 %v1141, 0.0
      %v1200 = vmax.f32 %v1146, 0.0
      %v1201 = vmax.f32 %v1151, 0.0
      %v1202 = vmax.f32 %v1156, 0.0
      %v1203 = vmax.f32 %v1161, 0.0
      %v1204 = vmax.f32 %v1166, 0.0
      %v1205 = vmax.f32 %v1171, 0.0
      %v1206 = vmax.f32 %v1176, 0.0
      %v1207 = vmax.f32 %v1181, 0.0
      %v1208 = vmax.f32 %v1186, 0.0
      %v1209 = vmax.f32 %v1191, 0.0
      %v1210 = vld [vmem:[%s8] sm:$0xff]
      %v1211 = vld [vmem:[%s8 + $0x8] sm:$0xff]
      %v1212 = vld [vmem:[%s8 + $0x10] sm:$0xff]
      %v1213 = vld [vmem:[%s8 + $0x18] sm:$0xff]
      %v1214 = vld [vmem:[%s9] sm:$0x1]
      %v1216 = vlaneseq
      %v1217 = vshrl.u32 %v1216, 7
      %v1218 = vsub.s32 0, %v1217
      %v1219 = vrot.slane %v1214, %v1218
      %v1222 = vsel %vm637, %v1194, 0
      %v1225 = vsel %vm637, %v1195, 0
      %v1228 = vsel %vm637, %v1196, 0
      %v1231 = vsel %vm637, %v1197, 0
      %v1234 = vsel %vm637, %v1198, 0
      %v1237 = vsel %vm637, %v1199, 0
      %v1240 = vsel %vm637, %v1200, 0
      %v1243 = vsel %vm637, %v1201, 0
      %v1246 = vsel %vm637, %v1202, 0
      %v1249 = vsel %vm637, %v1203, 0
      %v1252 = vsel %vm637, %v1204, 0
      %v1255 = vsel %vm637, %v1205, 0
      %v1258 = vsel %vm637, %v1206, 0
      %v1261 = vsel %vm637, %v1207, 0
      %v1264 = vsel %vm637, %v1208, 0
      %v1267 = vsel %vm637, %v1209, 0
      %1269 = vmatprep.subr.mxu0 0.0
      %1270 = vmatpush1.msra.mxu0 %v1210
      %1271 = vmatprep.subr.mxu0 0.0
      %1272 = vmatpush1.msra.mxu0 %v1211
      %1273 = vmatprep.subr.mxu0 0.0
      %1274 = vmatpush1.msra.mxu0 %v1212
      %1275 = vmatprep.subr.mxu0 0.0
      %1276 = vmatpush1.msra.mxu0 %v1213
      %1277 = vmatprep.subr.mxu0 0.0
      %1278 = vmatpush1.msra.mxu0 0.0
      %1279 = vmatprep.subr.mxu0 0.0
      %1280 = vmatpush1.msra.mxu0 0.0
      %1281 = vmatprep.subr.mxu0 0.0
      %1282 = vmatpush1.msra.mxu0 0.0
      %1283 = vmatprep.subr.mxu0 0.0
      %1284 = vmatpush1.msra.mxu0 0.0
      %1285 = vmatprep.subr.mxu0 0.0
      %1286 = vmatpush1.msra.mxu0 0.0
      %1287 = vmatprep.subr.mxu0 0.0
      %1288 = vmatpush1.msra.mxu0 0.0
      %1289 = vmatprep.subr.mxu0 0.0
      %1290 = vmatpush1.msra.mxu0 0.0
      %1291 = vmatprep.subr.mxu0 0.0
      %1292 = vmatpush1.msra.mxu0 0.0
      %1293 = vmatprep.subr.mxu0 0.0
      %1294 = vmatpush1.msra.mxu0 0.0
      %1295 = vmatprep.subr.mxu0 0.0
      %1296 = vmatpush1.msra.mxu0 0.0
      %1297 = vmatprep.subr.mxu0 0.0
      %1298 = vmatpush1.msra.mxu0 0.0
      %1299 = vmatprep.subr.mxu0 0.0
      %1300 = vmatpush1.msra.mxu0 0.0
      %1301 = vmatprep.subr.mxu0 0.0
      %1302 = vmatpush1.msra.mxu0 0.0
      %1303 = vmatprep.subr.mxu0 0.0
      %1304 = vmatpush1.msra.mxu0 0.0
      %1305 = vmatprep.subr.mxu0 0.0
      %1306 = vmatpush1.msra.mxu0 0.0
      %1307 = vmatprep.subr.mxu0 0.0
      %1308 = vmatpush1.msra.mxu0 0.0
      %1309 = vmatprep.subr.mxu0 0.0
      %1310 = vmatpush1.msra.mxu0 0.0
      %1311 = vmatprep.subr.mxu0 0.0
      %1312 = vmatpush1.msra.mxu0 0.0
      %1313 = vmatprep.subr.mxu0 0.0
      %1314 = vmatpush1.msra.mxu0 0.0
      %1315 = vmatprep.subr.mxu0 0.0
      %1316 = vmatpush1.msra.mxu0 0.0
      %1317 = vmatprep.subr.mxu0 0.0
      %1318 = vmatpush1.msra.mxu0 0.0
      %1319 = vmatprep.subr.mxu0 0.0
      %1320 = vmatpush1.msra.mxu0 0.0
      %1321 = vmatprep.subr.mxu0 0.0
      %1322 = vmatpush1.msra.mxu0 0.0
      %1323 = vmatprep.subr.mxu0 0.0
      %1324 = vmatpush1.msra.mxu0 0.0
      %1325 = vmatprep.subr.mxu0 0.0
      %1326 = vmatpush1.msra.mxu0 0.0
      %1327 = vmatprep.subr.mxu0 0.0
      %1328 = vmatpush1.msra.mxu0 0.0
      %1329 = vmatprep.subr.mxu0 0.0
      %1330 = vmatpush1.msra.mxu0 0.0
      %1331 = vmatprep.subr.mxu0 0.0
      %1332 = vmatpush1.msra.mxu0 0.0
      %1333 = vmatprep.mubr.f32.mxu0 0.0
      %1334 = vmatmul.mubr.f32.gmra.mrb[0].mxu0 %v1222
      %v1335 = vpop.f32.mrb[0].mxu0
      %v1336 = vadd.f32 %v1219, %v1335
      %v1337 = vpop.f32.mrb[0].mxu0
      %1338 = vmatprep.mubr.f32.mxu0 0.0
      %1339 = vmatmul.mubr.f32.gmra.mrb[0].mxu0 %v1225
      %v1340 = vpop.f32.mrb[0].mxu0
      %v1341 = vadd.f32 %v1219, %v1340
      %v1342 = vpop.f32.mrb[0].mxu0
      %1343 = vmatprep.mubr.f32.mxu0 0.0
      %1344 = vmatmul.mubr.f32.gmra.mrb[0].mxu0 %v1228
      %v1345 = vpop.f32.mrb[0].mxu0
      %v1346 = vadd.f32 %v1219, %v1345
      %v1347 = vpop.f32.mrb[0].mxu0
      %1348 = vmatprep.mubr.f32.mxu0 0.0
      %1349 = vmatmul.mubr.f32.gmra.mrb[0].mxu0 %v1231
      %v1350 = vpop.f32.mrb[0].mxu0
      %v1351 = vadd.f32 %v1219, %v1350
      %v1352 = vpop.f32.mrb[0].mxu0
      %1353 = vmatprep.mubr.f32.mxu0 0.0
      %1354 = vmatmul.mubr.f32.gmra.mrb[0].mxu0 %v1234
      %v1355 = vpop.f32.mrb[0].mxu0
      %v1356 = vadd.f32 %v1219, %v1355
      %v1357 = vpop.f32.mrb[0].mxu0
      %1358 = vmatprep.mubr.f32.mxu0 0.0
      %1359 = vmatmul.mubr.f32.gmra.mrb[0].mxu0 %v1237
      %v1360 = vpop.f32.mrb[0].mxu0
      %v1361 = vadd.f32 %v1219, %v1360
      %v1362 = vpop.f32.mrb[0].mxu0
      %1363 = vmatprep.mubr.f32.mxu0 0.0
      %1364 = vmatmul.mubr.f32.gmra.mrb[0].mxu0 %v1240
      %v1365 = vpop.f32.mrb[0].mxu0
      %v1366 = vadd.f32 %v1219, %v1365
      %v1367 = vpop.f32.mrb[0].mxu0
      %1368 = vmatprep.mubr.f32.mxu0 0.0
      %1369 = vmatmul.mubr.f32.gmra.mrb[0].mxu0 %v1243
      %v1370 = vpop.f32.mrb[0].mxu0
      %v1371 = vadd.f32 %v1219, %v1370
      %v1372 = vpop.f32.mrb[0].mxu0
      %1373 = vmatprep.mubr.f32.mxu0 0.0
      %1374 = vmatmul.mubr.f32.gmra.mrb[0].mxu0 %v1246
      %v1375 = vpop.f32.mrb[0].mxu0
      %v1376 = vadd.f32 %v1219, %v1375
      %v1377 = vpop.f32.mrb[0].mxu0
      %1378 = vmatprep.mubr.f32.mxu0 0.0
      %1379 = vmatmul.mubr.f32.gmra.mrb[0].mxu0 %v1249
      %v1380 = vpop.f32.mrb[0].mxu0
      %v1381 = vadd.f32 %v1219, %v1380
      %v1382 = vpop.f32.mrb[0].mxu0
      %1383 = vmatprep.mubr.f32.mxu0 0.0
      %1384 = vmatmul.mubr.f32.gmra.mrb[0].mxu0 %v1252
      %v1385 = vpop.f32.mrb[0].mxu0
      %v1386 = vadd.f32 %v1219, %v1385
      %v1387 = vpop.f32.mrb[0].mxu0
      %1388 = vmatprep.mubr.f32.mxu0 0.0
      %1389 = vmatmul.mubr.f32.gmra.mrb[0].mxu0 %v1255
      %v1390 = vpop.f32.mrb[0].mxu0
      %v1391 = vadd.f32 %v1219, %v1390
      %v1392 = vpop.f32.mrb[0].mxu0
      %1393 = vmatprep.mubr.f32.mxu0 0.0
      %1394 = vmatmul.mubr.f32.gmra.mrb[0].mxu0 %v1258
      %v1395 = vpop.f32.mrb[0].mxu0
      %v1396 = vadd.f32 %v1219, %v1395
      %v1397 = vpop.f32.mrb[0].mxu0
      %1398 = vmatprep.mubr.f32.mxu0 0.0
      %1399 = vmatmul.mubr.f32.gmra.mrb[0].mxu0 %v1261
      %v1400 = vpop.f32.mrb[0].mxu0
      %v1401 = vadd.f32 %v1219, %v1400
      %v1402 = vpop.f32.mrb[0].mxu0
      %1403 = vmatprep.mubr.f32.mxu0 0.0
      %1404 = vmatmul.mubr.f32.gmra.mrb[0].mxu0 %v1264
      %v1405 = vpop.f32.mrb[0].mxu0
      %v1406 = vadd.f32 %v1219, %v1405
      %v1407 = vpop.f32.mrb[0].mxu0
      %1408 = vmatprep.mubr.f32.mxu0 0.0
      %1409 = vmatmul.mubr.f32.gmra.mrb[0].mxu0 %v1267
      %v1410 = vpop.f32.mrb[0].mxu0
      %v1411 = vadd.f32 %v1219, %v1410
      %v1412 = vpop.f32.mrb[0].mxu0
      %1413 = vdwg.mxu0
      %v1414 = vxor.u32 %v1336, 2147483648
      %v1415 = vxor.u32 %v1341, 2147483648
      %v1416 = vxor.u32 %v1346, 2147483648
      %v1417 = vxor.u32 %v1351, 2147483648
      %v1418 = vxor.u32 %v1356, 2147483648
      %v1419 = vxor.u32 %v1361, 2147483648
      %v1420 = vxor.u32 %v1366, 2147483648
      %v1421 = vxor.u32 %v1371, 2147483648
      %v1422 = vxor.u32 %v1376, 2147483648
      %v1423 = vxor.u32 %v1381, 2147483648
      %v1424 = vxor.u32 %v1386, 2147483648
      %v1425 = vxor.u32 %v1391, 2147483648
      %v1426 = vxor.u32 %v1396, 2147483648
      %v1427 = vxor.u32 %v1401, 2147483648
      %v1428 = vxor.u32 %v1406, 2147483648
      %v1429 = vxor.u32 %v1411, 2147483648
      %v1430 = vmul.f32 %v1414, 1.442695
      %v1431 = vpow.pop %v1430
      %v1432 = vmul.f32 %v1415, 1.442695
      %v1433 = vpow.pop %v1432
      %v1434 = vmul.f32 %v1416, 1.442695
      %v1435 = vpow.pop %v1434
      %v1436 = vmul.f32 %v1417, 1.442695
      %v1437 = vpow.pop %v1436
      %v1438 = vmul.f32 %v1418, 1.442695
      %v1439 = vpow.pop %v1438
      %v1440 = vmul.f32 %v1419, 1.442695
      %v1441 = vpow.pop %v1440
      %v1442 = vmul.f32 %v1420, 1.442695
      %v1443 = vpow.pop %v1442
      %v1444 = vmul.f32 %v1421, 1.442695
      %v1445 = vpow.pop %v1444
      %v1446 = vmul.f32 %v1422, 1.442695
      %v1447 = vpow.pop %v1446
      %v1448 = vmul.f32 %v1423, 1.442695
      %v1449 = vpow.pop %v1448
      %v1450 = vmul.f32 %v1424, 1.442695
      %v1451 = vpow.pop %v1450
      %v1452 = vmul.f32 %v1425, 1.442695
      %v1453 = vpow.pop %v1452
      %v1454 = vmul.f32 %v1426, 1.442695
      %v1455 = vpow.pop %v1454
      %v1456 = vmul.f32 %v1427, 1.442695
      %v1457 = vpow.pop %v1456
      %v1458 = vmul.f32 %v1428, 1.442695
      %v1459 = vpow.pop %v1458
      %v1460 = vmul.f32 %v1429, 1.442695
      %v1461 = vpow.pop %v1460
      %v1462 = vadd.f32 %v1431, 1.0
      %v1463 = vadd.f32 %v1433, 1.0
      %v1464 = vadd.f32 %v1435, 1.0
      %v1465 = vadd.f32 %v1437, 1.0
      %v1466 = vadd.f32 %v1439, 1.0
      %v1467 = vadd.f32 %v1441, 1.0
      %v1468 = vadd.f32 %v1443, 1.0
      %v1469 = vadd.f32 %v1445, 1.0
      %v1470 = vadd.f32 %v1447, 1.0
      %v1471 = vadd.f32 %v1449, 1.0
      %v1472 = vadd.f32 %v1451, 1.0
      %v1473 = vadd.f32 %v1453, 1.0
      %v1474 = vadd.f32 %v1455, 1.0
      %v1475 = vadd.f32 %v1457, 1.0
      %v1476 = vadd.f32 %v1459, 1.0
      %v1477 = vadd.f32 %v1461, 1.0
      %v1478 = vrcp.pop %v1462
      %v1479 = vmul.f32 1.0, %v1478
      %v1480 = vrcp.pop %v1463
      %v1481 = vmul.f32 1.0, %v1480
      %v1482 = vrcp.pop %v1464
      %v1483 = vmul.f32 1.0, %v1482
      %v1484 = vrcp.pop %v1465
      %v1485 = vmul.f32 1.0, %v1484
      %v1486 = vrcp.pop %v1466
      %v1487 = vmul.f32 1.0, %v1486
      %v1488 = vrcp.pop %v1467
      %v1489 = vmul.f32 1.0, %v1488
      %v1490 = vrcp.pop %v1468
      %v1491 = vmul.f32 1.0, %v1490
      %v1492 = vrcp.pop %v1469
      %v1493 = vmul.f32 1.0, %v1492
      %v1494 = vrcp.pop %v1470
      %v1495 = vmul.f32 1.0, %v1494
      %v1496 = vrcp.pop %v1471
      %v1497 = vmul.f32 1.0, %v1496
      %v1498 = vrcp.pop %v1472
      %v1499 = vmul.f32 1.0, %v1498
      %v1500 = vrcp.pop %v1473
      %v1501 = vmul.f32 1.0, %v1500
      %v1502 = vrcp.pop %v1474
      %v1503 = vmul.f32 1.0, %v1502
      %v1504 = vrcp.pop %v1475
      %v1505 = vmul.f32 1.0, %v1504
      %v1506 = vrcp.pop %v1476
      %v1507 = vmul.f32 1.0, %v1506
      %v1508 = vrcp.pop %v1477
      %v1509 = vmul.f32 1.0, %v1508
      %1526 = vrot.lane.b32.xlu0 %v753, 64
      %v1527 = vpop.permute.xlu0 %1526
      %1528 = vrot.lane.b32.xlu0 %v758, 64
      %v1529 = vpop.permute.xlu0 %1528
      %1530 = vrot.lane.b32.xlu0 %v763, 64
      %v1531 = vpop.permute.xlu0 %1530
      %1532 = vrot.lane.b32.xlu0 %v768, 64
      %v1533 = vpop.permute.xlu0 %1532
      %1534 = vrot.lane.b32.xlu0 %v773, 64
      %v1535 = vpop.permute.xlu0 %1534
      %1536 = vrot.lane.b32.xlu0 %v778, 64
      %v1537 = vpop.permute.xlu0 %1536
      %1538 = vrot.lane.b32.xlu0 %v783, 64
      %v1539 = vpop.permute.xlu0 %1538
      %1540 = vrot.lane.b32.xlu0 %v788, 64
      %v1541 = vpop.permute.xlu0 %1540
      %1542 = vrot.lane.b32.xlu0 %v793, 64
      %v1543 = vpop.permute.xlu0 %1542
      %1544 = vrot.lane.b32.xlu0 %v798, 64
      %v1545 = vpop.permute.xlu0 %1544
      %1546 = vrot.lane.b32.xlu0 %v803, 64
      %v1547 = vpop.permute.xlu0 %1546
      %1548 = vrot.lane.b32.xlu0 %v808, 64
      %v1549 = vpop.permute.xlu0 %1548
      %1550 = vrot.lane.b32.xlu0 %v813, 64
      %v1551 = vpop.permute.xlu0 %1550
      %1552 = vrot.lane.b32.xlu0 %v818, 64
      %v1553 = vpop.permute.xlu0 %1552
      %1554 = vrot.lane.b32.xlu0 %v823, 64
      %v1555 = vpop.permute.xlu0 %1554
      %1556 = vrot.lane.b32.xlu0 %v828, 64
      %v1557 = vpop.permute.xlu0 %1556
      %v1574 = vsel %vm416, %v1479, %v1527
      %v1575 = vsel %vm416, %v1481, %v1529
      %v1576 = vsel %vm416, %v1483, %v1531
      %v1577 = vsel %vm416, %v1485, %v1533
      %v1578 = vsel %vm416, %v1487, %v1535
      %v1579 = vsel %vm416, %v1489, %v1537
      %v1580 = vsel %vm416, %v1491, %v1539
      %v1581 = vsel %vm416, %v1493, %v1541
      %v1582 = vsel %vm416, %v1495, %v1543
      %v1583 = vsel %vm416, %v1497, %v1545
      %v1584 = vsel %vm416, %v1499, %v1547
      %v1585 = vsel %vm416, %v1501, %v1549
      %v1586 = vsel %vm416, %v1503, %v1551
      %v1587 = vsel %vm416, %v1505, %v1553
      %v1588 = vsel %vm416, %v1507, %v1555
      %v1589 = vsel %vm416, %v1509, %v1557
      %vm1590 = vcmask 785408
      %v1591 = vsel %vm1590, %v1574, 0.0
      %v1592 = vsel %vm1590, %v1575, 0.0
      %v1593 = vsel %vm1590, %v1576, 0.0
      %v1594 = vsel %vm1590, %v1577, 0.0
      %v1595 = vsel %vm1590, %v1578, 0.0
      %v1596 = vsel %vm1590, %v1579, 0.0
      %v1597 = vsel %vm1590, %v1580, 0.0
      %v1598 = vsel %vm1590, %v1581, 0.0
      %v1599 = vsel %vm1590, %v1582, 0.0
      %v1600 = vsel %vm1590, %v1583, 0.0
      %v1601 = vsel %vm1590, %v1584, 0.0
      %v1602 = vsel %vm1590, %v1585, 0.0
      %v1603 = vsel %vm1590, %v1586, 0.0
      %v1604 = vsel %vm1590, %v1587, 0.0
      %v1605 = vsel %vm1590, %v1588, 0.0
      %v1606 = vsel %vm1590, %v1589, 0.0
      %1607 = vst [vmem:[%s383] sm:$0xff] %v1591
      %1608 = vst [vmem:[%s383 + $0x8] sm:$0xff] %v1592
      %1609 = vst [vmem:[%s383 + $0x10] sm:$0xff] %v1593
      %1610 = vst [vmem:[%s383 + $0x18] sm:$0xff] %v1594
      %1611 = vst [vmem:[%s383 + $0x20] sm:$0xff] %v1595
      %1612 = vst [vmem:[%s383 + $0x28] sm:$0xff] %v1596
      %1613 = vst [vmem:[%s383 + $0x30] sm:$0xff] %v1597
      %1614 = vst [vmem:[%s383 + $0x38] sm:$0xff] %v1598
      %1615 = vst [vmem:[%s383 + $0x40] sm:$0xff] %v1599
      %1616 = vst [vmem:[%s383 + $0x48] sm:$0xff] %v1600
      %1617 = vst [vmem:[%s383 + $0x50] sm:$0xff] %v1601
      %1618 = vst [vmem:[%s383 + $0x58] sm:$0xff] %v1602
      %1619 = vst [vmem:[%s383 + $0x60] sm:$0xff] %v1603
      %1620 = vst [vmem:[%s383 + $0x68] sm:$0xff] %v1604
      %1621 = vst [vmem:[%s383 + $0x70] sm:$0xff] %v1605
      %1622 = vst [vmem:[%s383 + $0x78] sm:$0xff] %v1606
      %s1623 = smul.u32 16, %s21
      %p1624 = scmp.lt.s32.totalorder %s1623, 31
      %s1625 = scalar_select %p1624, %s1623, 31
      %s1626 = smul.addr %s1625, 8
      %s1627 = scalar_lea.vmem %s10, %s1626
      // Predicated region
      $region61: #{vae_forward.1} parent=59 // pred_check
        %p1628 = pneg %p259
      $region62: #{vae_forward.1} parent=59 // pred_check_branch
        %1630 = sbr.rel (%p1628) target = $region64
      $region63: #{vae_forward.1} parent=59 // pred_region
        %s1631 = smul.u32 16, %s21
      $region64: #{vae_forward.1} parent=59 // pred_fallthru
        _
    $region60: #{vae_forward.1} parent=5 // pred_fallthru
      _
    %p1632 = scmp.le.s32.totalorder 2, %s16
    // Predicated region
    $region65: #{vae_forward.1} parent=5 // pred_check
      %p1633 = pneg %p1632
    $region66: #{vae_forward.1} parent=5 // pred_check_branch
      %1635 = sbr.rel (%p1633) target = $region68
    $region67: #{vae_forward.1} parent=5 // pred_region
      %s1636 = ssub.s32 %s16, 2
      // Predicated region
      $region69: #{vae_forward.1} parent=67 // pred_check
        %p1637 = pneg %p265
      $region70: #{vae_forward.1} parent=67 // pred_check_branch
        %1639 = sbr.rel (%p1637) target = $region72
      $region71: #{vae_forward.1} parent=67 // pred_region
        %s1640 = smul.u32 16, %s22
        %p1641 = scmp.lt.s32.totalorder %s1640, 31
        %s1642 = scalar_select %p1641, %s1640, 31
        %s1643 = smul.addr %s1642, 8
        %s1644 = scalar_lea.vmem %s10, %s1643
      $region72: #{vae_forward.1} parent=67 // pred_fallthru
        _
    $region68: #{vae_forward.1} parent=5 // pred_fallthru
      _
  $region6: #{vae_forward.1} parent=0 // loop_footer
    %s20 = sadd.s32 1, %s16
  $region7: #{vae_forward.1} parent=0 // loop_footer_branch
    %15 = sbr.rel target = $region3
  $region8: #{vae_forward.1} parent=0 // loop_exit
    _

</llo_original>
